<compile_context>
chip_gen: v6e
topology: v6e:2x2x1
jax: 0.10.0
libtpu: 0.0.40
codegen_flags: <defaults>
</compile_context>

<pallas_src>
import jax
import jax.numpy as jnp
from jax.experimental import pallas as pl
from jax.experimental.pallas import tpu as pltpu

EPS = 1e-5        # PyTorch InstanceNorm1d default eps
K_CLAMP = 80.0    # exp(80) finite in f32/bf16; replaces torch.nan_to_num overflow guard


def _encoder_layer_kernel(alpha_ref,            # SMEM (1,) f32 (scalar prefetch)
                          x_ref,                # (bt, n, d)   f32
                          dist_ref,             # (bt, n, tkv) bf16
                          wqkv_ref,             # (d, 3d)      bf16  [Wq|Wk|Wv]
                          g1_ref, be1_ref,      # (1, d)       f32
                          w1_ref, b1_ref,       # (d, ff) bf16, (1, ff) f32
                          w2_ref, b2_ref,       # (ff, d) bf16, (1, d)  f32
                          g2_ref, be2_ref,      # (1, d)       f32
                          out_ref,              # (bt, n, d)   f32
                          sq_ref,               # VMEM (bt*n, d)    f32  sigmoid(q)
                          rhs_ref,              # VMEM (bt, n, 2d)  bf16 [exp(k)*v | exp(k)]
                          mix_ref):             # VMEM (bt, n, 2d)  f32  accumulator
    bt, n, d = x_ref.shape
    tkv = dist_ref.shape[2]
    kv = pl.program_id(1)
    num_kv = pl.num_programs(1)

    # ---- first kv step: fused QKV projection (bf16 operands, f32 accumulation) ----
    @pl.when(kv == 0)
    def _():
        x = x_ref[...].reshape(bt * n, d)
        qkv = jnp.dot(x.astype(jnp.bfloat16), wqkv_ref[...],
                      preferred_element_type=jnp.float32)            # (bt*n, 3d)
        q = qkv[:, :d]
        k = jnp.minimum(qkv[:, d:2 * d], K_CLAMP)   # pre-exp clamp: exp_k never overflows
        v = qkv[:, 2 * d:]
        sq_ref[...] = jax.nn.sigmoid(q)
        ek = jnp.exp(k)
        rhs_ref[...] = (jnp.concatenate([ek * v, ek], axis=-1)
                        .reshape(bt, n, 2 * d).astype(jnp.bfloat16))
        mix_ref[...] = jnp.zeros_like(mix_ref)

    # ---- AAFM mixing: exp(alpha*dist_chunk) @ [exp_k*v | exp_k], accumulated ----
    alpha = alpha_ref[0]
    exp_bias = jnp.exp(alpha.astype(jnp.bfloat16) * dist_ref[...])    # (bt, n, tkv) bf16
    start = pl.multiple_of(kv * tkv, tkv)
    kv_rhs = rhs_ref[:, pl.ds(start, tkv), :]                         # (bt, tkv, 2d) bf16
    mix_ref[...] += jnp.einsum("bnm,bmf->bnf", exp_bias, kv_rhs,
                               preferred_element_type=jnp.float32)

    # ---- last kv step: finish AAFM, Add&Norm1, FFN, Add&Norm2 ----
    @pl.when(kv == num_kv - 1)
    def _():
        mixed = mix_ref[...].reshape(bt * n, 2 * d)
        num = mixed[:, :d]
        den = mixed[:, d:]                                            # strictly positive
        aafm = sq_ref[...] * (num * pl.reciprocal(den, approx=True))

        # Add & InstanceNorm 1 (single reduction pass over n per channel)
        a1 = (x_ref[...].reshape(bt * n, d) + aafm).reshape(bt, n, d)
        mean1 = jnp.mean(a1, axis=1, keepdims=True)
        var1 = jnp.mean(a1 * a1, axis=1, keepdims=True) - mean1 * mean1
        out1 = ((a1 - mean1) * jax.lax.rsqrt(var1 + EPS)).reshape(bt * n, d)
        out1 = out1 * g1_ref[...] + be1_ref[...]

        # Feed forward: W2(relu(W1(out1)))
        h = jnp.dot(out1.astype(jnp.bfloat16), w1_ref[...],
                    preferred_element_type=jnp.float32) + b1_ref[...]
        h = jnp.maximum(h, 0.0)
        ffn = jnp.dot(h.astype(jnp.bfloat16), w2_ref[...],
                      preferred_element_type=jnp.float32) + b2_ref[...]

        # Add & InstanceNorm 2
        a2 = (out1 + ffn).reshape(bt, n, d)
        mean2 = jnp.mean(a2, axis=1, keepdims=True)
        var2 = jnp.mean(a2 * a2, axis=1, keepdims=True) - mean2 * mean2
        out3 = (a2 - mean2) * jax.lax.rsqrt(var2 + EPS) * g2_ref[...] + be2_ref[...]
        out_ref[...] = out3.astype(out_ref.dtype)


def prepare_params(params):
    """One-time weight packing / bf16 casting (hoisted out of the forward call)."""
    return {
        "alpha": params["alpha"].reshape(-1)[:1].astype(jnp.float32),
        "wqkv": jnp.concatenate([params["wq"], params["wk"], params["wv"]],
                                axis=1).astype(jnp.bfloat16),
        "gamma1": params["gamma1"].astype(jnp.float32),
        "beta1": params["beta1"].astype(jnp.float32),
        "w1": params["w1"].astype(jnp.bfloat16),
        "b1": params["b1"].astype(jnp.float32),
        "w2": params["w2"].astype(jnp.bfloat16),
        "b2": params["b2"].astype(jnp.float32),
        "gamma2": params["gamma2"].astype(jnp.float32),
        "beta2": params["beta2"].astype(jnp.float32),
    }


def _pick_block_batch(B, n):
    # Prefer bt*n >= 256 MXU rows while keeping >= 2 batch grid steps when the
    # batch allows it (megacore split + DMA/compute overlap).
    divisors = [t for t in range(1, B + 1) if B % t == 0]
    multi_step = [t for t in divisors if B // t >= 2]
    for t in multi_step:
        if t * n >= 256:
            return t
    return multi_step[-1] if multi_step else B


def _pick_kv_block(n):
    # Tile the kv axis for large n so the (bt, n, tkv) exp-bias block stays
    # bounded in VMEM; kv tiles must be lane-aligned (multiple of 128/256).
    if n <= 1024:
        return n
    for c in (1024, 512, 256, 128):
        if n % c == 0:
            return c
    return n


def encoder_layer(input1, negative_scale_dist, prepped, *,
                  block_batch=None, kv_block=None):
    """input1: (B, n, d) f32; negative_scale_dist: (B, n, n).
    `prepped` is the output of prepare_params()."""
    B, n, d = input1.shape
    ff = prepped["w1"].shape[1]

    bt = block_batch if block_batch is not None else _pick_block_batch(B, n)
    assert B % bt == 0, "block_batch must divide the batch size"
    tkv = kv_block if kv_block is not None else _pick_kv_block(n)
    assert n % tkv == 0, "kv_block must divide n"

    dist = negative_scale_dist.astype(jnp.bfloat16)   # halves the dominant HBM input

    full = lambda shape: pl.BlockSpec(shape, lambda b, k, a: (0,) * len(shape))

    return pl.pallas_call(
        _encoder_layer_kernel,
        out_shape=jax.ShapeDtypeStruct((B, n, d), jnp.float32),
        grid_spec=pltpu.PrefetchScalarGridSpec(
            num_scalar_prefetch=1,                                   # alpha -> SMEM
            grid=(B // bt, n // tkv),
            in_specs=[
                pl.BlockSpec((bt, n, d), lambda b, k, a: (b, 0, 0)),    # input1
                pl.BlockSpec((bt, n, tkv), lambda b, k, a: (b, 0, k)),  # dist (bf16)
                full((d, 3 * d)),     # packed [Wq | Wk | Wv] bf16
                full((1, d)),         # gamma1
                full((1, d)),         # beta1
                full((d, ff)),        # W1 bf16
                full((1, ff)),        # b1
                full((ff, d)),        # W2 bf16
                full((1, d)),         # b2
                full((1, d)),         # gamma2
                full((1, d)),         # beta2
            ],
            out_specs=pl.BlockSpec((bt, n, d), lambda b, k, a: (b, 0, 0)),
            scratch_shapes=[
                pltpu.VMEM((bt * n, d), jnp.float32),       # sigmoid(q)
                pltpu.VMEM((bt, n, 2 * d), jnp.bfloat16),   # [exp(k)*v | exp(k)]
                pltpu.VMEM((bt, n, 2 * d), jnp.float32),    # mixed accumulator
            ]),
        compiler_params=pltpu.CompilerParams(
            dimension_semantics=("parallel", "arbitrary"),
            vmem_limit_bytes=48 * 1024 * 1024),
    )(prepped["alpha"], input1, dist, prepped["wqkv"],
      prepped["gamma1"], prepped["beta1"],
      prepped["w1"], prepped["b1"], prepped["w2"], prepped["b2"],
      prepped["gamma2"], prepped["beta2"])


def encoder_layer_ref(x, dist, p):
    """Pure-JAX f32 reference mirroring the PyTorch forward, for validation."""
    q = x @ p["wq"]
    k = x @ p["wk"]
    v = x @ p["wv"]
    eb = jnp.exp(p["alpha"][0, 0] * dist)
    ek = jnp.exp(k)
    num = jnp.nan_to_num(jnp.einsum("bnm,bmd->bnd", eb, ek * v))
    den = jnp.nan_to_num(jnp.einsum("bnm,bmd->bnd", eb, ek))
    aafm = jax.nn.sigmoid(q) * jnp.nan_to_num(num / den)

    def add_norm(a, b, g, be):
        s = a + b
        m = jnp.mean(s, axis=1, keepdims=True)
        var = jnp.mean((s - m) ** 2, axis=1, keepdims=True)
        return (s - m) * jax.lax.rsqrt(var + EPS) * g + be

    out1 = add_norm(x, aafm, p["gamma1"], p["beta1"])
    ffn = jnp.maximum(out1 @ p["w1"] + p["b1"], 0.0) @ p["w2"] + p["b2"]
    return add_norm(out1, ffn, p["gamma2"], p["beta2"])


def make_params(key, d, ff):
    ks = jax.random.split(key, 10)
    s_qkv, s_ff = 0.1, 0.05
    return {
        "wq": jax.random.normal(ks[0], (d, d), jnp.float32) * s_qkv,
        "wk": jax.random.normal(ks[1], (d, d), jnp.float32) * s_qkv,
        "wv": jax.random.normal(ks[2], (d, d), jnp.float32) * s_qkv,
        "alpha": jnp.ones((1, 1), jnp.float32),             # nn.Parameter([1.0])
        "gamma1": jnp.ones((1, d), jnp.float32),             # InstanceNorm affine init
        "beta1": jnp.zeros((1, d), jnp.float32),
        "w1": jax.random.normal(ks[3], (d, ff), jnp.float32) * s_ff,
        "b1": jax.random.normal(ks[4], (1, ff), jnp.float32) * s_ff,
        "w2": jax.random.normal(ks[5], (ff, d), jnp.float32) * s_ff,
        "b2": jax.random.normal(ks[6], (1, d), jnp.float32) * s_ff,
        "gamma2": jnp.ones((1, d), jnp.float32),
        "beta2": jnp.zeros((1, d), jnp.float32),
    }


if __name__ == "__main__":
    # Small but representative ICAM shapes: embedding_dim=128, ff_hidden_dim=512.
    B, n, d, ff = 8, 16, 128, 512

    key = jax.random.PRNGKey(0)
    k_x, k_dist, k_p = jax.random.split(key, 3)

    input1 = jax.random.normal(k_x, (B, n, d), jnp.float32)
    # negative scaled distance bias: non-positive, like -alpha * log_scale * dist
    negative_scale_dist = -jnp.abs(
        jax.random.normal(k_dist, (B, n, n), jnp.float32)) * 0.5

    params = make_params(k_p, d, ff)
    prepped = prepare_params(params)            # one-time packing / bf16 cast

    out = encoder_layer(input1, negative_scale_dist, prepped)
    out = jax.block_until_ready(out)

    ref = encoder_layer_ref(input1, negative_scale_dist, params)
    assert out.shape == (B, n, d)
    # bf16 MXU operands, bf16 dist/exp-bias, approx reciprocal -> loosened
    # tolerance vs. the f32 reference (outputs are unit-scale after InstanceNorm).
    assert jnp.allclose(out, ref, rtol=8e-2, atol=8e-2), "mismatch vs reference"

    print("KERNEL_OK")
</pallas_src>

<mosaic_0001>
module attributes {stable_mosaic.version = 11 : i64} {
  func.func @_encoder_layer_kernel(%arg0: i32, %arg1: i32, %arg2: memref<1xf32, #tpu.memory_space<smem>>, %arg3: memref<4x16x128xf32, #tpu.memory_space<vmem>>, %arg4: memref<4x16x16xbf16, #tpu.memory_space<vmem>>, %arg5: memref<128x384xbf16, #tpu.memory_space<vmem>>, %arg6: memref<1x128xf32, #tpu.memory_space<vmem>>, %arg7: memref<1x128xf32, #tpu.memory_space<vmem>>, %arg8: memref<128x512xbf16, #tpu.memory_space<vmem>>, %arg9: memref<1x512xf32, #tpu.memory_space<vmem>>, %arg10: memref<512x128xbf16, #tpu.memory_space<vmem>>, %arg11: memref<1x128xf32, #tpu.memory_space<vmem>>, %arg12: memref<1x128xf32, #tpu.memory_space<vmem>>, %arg13: memref<1x128xf32, #tpu.memory_space<vmem>>, %arg14: memref<4x16x128xf32, #tpu.memory_space<vmem>>, %arg15: memref<64x128xf32, #tpu.memory_space<vmem>>, %arg16: memref<4x16x256xbf16, #tpu.memory_space<vmem>>, %arg17: memref<4x16x256xf32, #tpu.memory_space<vmem>>) attributes {dimension_semantics = [#tpu.dimension_semantics<parallel>, #tpu.dimension_semantics<arbitrary>], iteration_bounds = array<i64: 2, 1>, scalar_prefetch = 1 : i64, scratch_operands = 3 : i64, tpu.core_type = #tpu.core_type<tc>, window_params = [{transform_indices = @transform_0, window_bounds = array<i64: 4, 16, 128>}, {transform_indices = @transform_1, window_bounds = array<i64: 4, 16, 16>}, {pipeline_mode = #tpu.pipeline_mode<synchronous>, transform_indices = @transform_2, window_bounds = array<i64: 128, 384>}, {pipeline_mode = #tpu.pipeline_mode<synchronous>, transform_indices = @transform_3, window_bounds = array<i64: 1, 128>}, {pipeline_mode = #tpu.pipeline_mode<synchronous>, transform_indices = @transform_4, window_bounds = array<i64: 1, 128>}, {pipeline_mode = #tpu.pipeline_mode<synchronous>, transform_indices = @transform_5, window_bounds = array<i64: 128, 512>}, {pipeline_mode = #tpu.pipeline_mode<synchronous>, transform_indices = @transform_6, window_bounds = array<i64: 1, 512>}, {pipeline_mode = #tpu.pipeline_mode<synchronous>, transform_indices = @transform_7, window_bounds = array<i64: 512, 128>}, {pipeline_mode = #tpu.pipeline_mode<synchronous>, transform_indices = @transform_8, window_bounds = array<i64: 1, 128>}, {pipeline_mode = #tpu.pipeline_mode<synchronous>, transform_indices = @transform_9, window_bounds = array<i64: 1, 128>}, {pipeline_mode = #tpu.pipeline_mode<synchronous>, transform_indices = @transform_10, window_bounds = array<i64: 1, 128>}, {transform_indices = @transform_11, window_bounds = array<i64: 4, 16, 128>}]} {
    %c0_i32 = arith.constant 0 : i32
    %0 = arith.cmpi eq, %arg1, %c0_i32 : i32
    %1 = arith.extui %0 : i1 to i32
    %c0_i32_0 = arith.constant 0 : i32
    %2 = arith.cmpi ne, %1, %c0_i32_0 : i32
    scf.if %2 {
      %c0_14 = arith.constant 0 : index
      %c0_15 = arith.constant 0 : index
      %c0_16 = arith.constant 0 : index
      %20 = vector.load %arg3[%c0_14, %c0_15, %c0_16] : memref<4x16x128xf32, #tpu.memory_space<vmem>>, vector<4x16x128xf32>
      %21 = vector.shape_cast %20 : vector<4x16x128xf32> to vector<64x128xf32>
      %22 = arith.truncf %21 : vector<64x128xf32> to vector<64x128xbf16>
      %c0_17 = arith.constant 0 : index
      %c0_18 = arith.constant 0 : index
      %23 = vector.load %arg5[%c0_17, %c0_18] : memref<128x384xbf16, #tpu.memory_space<vmem>>, vector<128x384xbf16>
      %cst_19 = arith.constant dense<0.000000e+00> : vector<64x384xf32>
      %24 = tpu.matmul %22, %23, %cst_19 {dimension_numbers = #tpu.dot_dimension_numbers<[1], [0], [0], [1], [0, 0, 1, 1], [], []>} : vector<64x128xbf16>, vector<128x384xbf16>, vector<64x384xf32> -> vector<64x384xf32>
      %25 = vector.extract_strided_slice %24 {offsets = [0, 0], sizes = [64, 128], strides = [1, 1]} : vector<64x384xf32> to vector<64x128xf32>
      %26 = vector.extract_strided_slice %24 {offsets = [0, 128], sizes = [64, 128], strides = [1, 1]} : vector<64x384xf32> to vector<64x128xf32>
      %cst_20 = arith.constant 8.000000e+01 : f32
      %27 = vector.broadcast %cst_20 : f32 to vector<64x128xf32>
      %28 = arith.minimumf %26, %27 : vector<64x128xf32>
      %29 = vector.extract_strided_slice %24 {offsets = [0, 256], sizes = [64, 128], strides = [1, 1]} : vector<64x384xf32> to vector<64x128xf32>
      %30 = arith.negf %25 : vector<64x128xf32>
      %31 = math.exp %30 : vector<64x128xf32>
      %cst_21 = arith.constant 1.000000e+00 : f32
      %32 = vector.broadcast %cst_21 : f32 to vector<64x128xf32>
      %33 = arith.addf %32, %31 : vector<64x128xf32>
      %34 = arith.divf %32, %33 : vector<64x128xf32>
      %c0_22 = arith.constant 0 : index
      %c0_23 = arith.constant 0 : index
      %35 = vector.load %arg15[%c0_22, %c0_23] : memref<64x128xf32, #tpu.memory_space<vmem>>, vector<64x128xf32>
      tpu.vector_store %arg15[%c0_22, %c0_23], %34 {strides = array<i32>} : memref<64x128xf32, #tpu.memory_space<vmem>>, vector<64x128xf32>,
      %36 = math.exp %28 : vector<64x128xf32>
      %37 = arith.mulf %36, %29 : vector<64x128xf32>
      %38 = tpu.concatenate %37, %36 in 1 : vector<64x128xf32>, vector<64x128xf32> -> vector<64x256xf32>
      %39 = vector.shape_cast %38 : vector<64x256xf32> to vector<4x16x256xf32>
      %40 = arith.truncf %39 : vector<4x16x256xf32> to vector<4x16x256xbf16>
      %c0_24 = arith.constant 0 : index
      %c0_25 = arith.constant 0 : index
      %c0_26 = arith.constant 0 : index
      %41 = vector.load %arg16[%c0_24, %c0_25, %c0_26] : memref<4x16x256xbf16, #tpu.memory_space<vmem>>, vector<4x16x256xbf16>
      tpu.vector_store %arg16[%c0_24, %c0_25, %c0_26], %40 {strides = array<i32>} : memref<4x16x256xbf16, #tpu.memory_space<vmem>>, vector<4x16x256xbf16>,
      %cst_27 = arith.constant 0.000000e+00 : f32
      %42 = vector.broadcast %cst_27 : f32 to vector<4x16x256xf32>
      %c0_28 = arith.constant 0 : index
      %c0_29 = arith.constant 0 : index
      %c0_30 = arith.constant 0 : index
      %43 = vector.load %arg17[%c0_28, %c0_29, %c0_30] : memref<4x16x256xf32, #tpu.memory_space<vmem>>, vector<4x16x256xf32>
      tpu.vector_store %arg17[%c0_28, %c0_29, %c0_30], %42 {strides = array<i32>} : memref<4x16x256xf32, #tpu.memory_space<vmem>>, vector<4x16x256xf32>,
    } else {
    }
    %c0 = arith.constant 0 : index
    %3 = memref.load %arg2[%c0] : memref<1xf32, #tpu.memory_space<smem>>
    %4 = arith.truncf %3 : f32 to bf16
    %c0_1 = arith.constant 0 : index
    %c0_2 = arith.constant 0 : index
    %c0_3 = arith.constant 0 : index
    %5 = vector.load %arg4[%c0_1, %c0_2, %c0_3] : memref<4x16x16xbf16, #tpu.memory_space<vmem>>, vector<4x16x16xbf16>
    %6 = vector.broadcast %4 : bf16 to vector<4x16x16xbf16>
    %7 = arith.mulf %6, %5 : vector<4x16x16xbf16>
    %8 = math.exp %7 : vector<4x16x16xbf16>
    %c16_i32 = arith.constant 16 : i32
    %9 = arith.muli %arg1, %c16_i32 : i32
    %10 = tpu.assume_multiple %9, 16 : i32
    %c0_4 = arith.constant 0 : index
    %11 = arith.index_cast %10 : i32 to index
    %c0_5 = arith.constant 0 : index
    %12 = vector.load %arg16[%c0_4, %11, %c0_5] : memref<4x16x256xbf16, #tpu.memory_space<vmem>>, vector<4x16x256xbf16>
    %c0_6 = arith.constant 0 : index
    %c0_7 = arith.constant 0 : index
    %c0_8 = arith.constant 0 : index
    %13 = vector.load %arg17[%c0_6, %c0_7, %c0_8] : memref<4x16x256xf32, #tpu.memory_space<vmem>>, vector<4x16x256xf32>
    "tpu.trace_start"() <{level = 10 : i32, message = "bnm,bmf->bnf"}> : () -> ()
    %cst = arith.constant dense<0.000000e+00> : vector<4x16x256xf32>
    %14 = tpu.matmul %8, %12, %cst {dimension_numbers = #tpu.dot_dimension_numbers<[2], [1], [1], [2], [0, 0, 0, 1, 1, 2], [0], [0]>} : vector<4x16x16xbf16>, vector<4x16x256xbf16>, vector<4x16x256xf32> -> vector<4x16x256xf32>
    "tpu.trace_stop"() : () -> ()
    %15 = arith.addf %13, %14 : vector<4x16x256xf32>
    %c0_9 = arith.constant 0 : index
    %c0_10 = arith.constant 0 : index
    %c0_11 = arith.constant 0 : index
    %16 = vector.load %arg17[%c0_9, %c0_10, %c0_11] : memref<4x16x256xf32, #tpu.memory_space<vmem>>, vector<4x16x256xf32>
    tpu.vector_store %arg17[%c0_9, %c0_10, %c0_11], %15 {strides = array<i32>} : memref<4x16x256xf32, #tpu.memory_space<vmem>>, vector<4x16x256xf32>,
    %c0_i32_12 = arith.constant 0 : i32
    %17 = arith.cmpi eq, %arg1, %c0_i32_12 : i32
    %18 = arith.extui %17 : i1 to i32
    %c0_i32_13 = arith.constant 0 : i32
    %19 = arith.cmpi ne, %18, %c0_i32_13 : i32
    scf.if %19 {
      %c0_14 = arith.constant 0 : index
      %c0_15 = arith.constant 0 : index
      %c0_16 = arith.constant 0 : index
      %20 = vector.load %arg17[%c0_14, %c0_15, %c0_16] : memref<4x16x256xf32, #tpu.memory_space<vmem>>, vector<4x16x256xf32>
      %21 = vector.shape_cast %20 : vector<4x16x256xf32> to vector<64x256xf32>
      %22 = vector.extract_strided_slice %21 {offsets = [0, 0], sizes = [64, 128], strides = [1, 1]} : vector<64x256xf32> to vector<64x128xf32>
      %23 = vector.extract_strided_slice %21 {offsets = [0, 128], sizes = [64, 128], strides = [1, 1]} : vector<64x256xf32> to vector<64x128xf32>
      %c0_17 = arith.constant 0 : index
      %c0_18 = arith.constant 0 : index
      %24 = vector.load %arg15[%c0_17, %c0_18] : memref<64x128xf32, #tpu.memory_space<vmem>>, vector<64x128xf32>
      %25 = tpu.reciprocal %23 {approx = true} : vector<64x128xf32> -> vector<64x128xf32>
      %26 = arith.mulf %22, %25 : vector<64x128xf32>
      %27 = arith.mulf %24, %26 : vector<64x128xf32>
      %c0_19 = arith.constant 0 : index
      %c0_20 = arith.constant 0 : index
      %c0_21 = arith.constant 0 : index
      %28 = vector.load %arg3[%c0_19, %c0_20, %c0_21] : memref<4x16x128xf32, #tpu.memory_space<vmem>>, vector<4x16x128xf32>
      %29 = vector.shape_cast %28 : vector<4x16x128xf32> to vector<64x128xf32>
      %30 = arith.addf %29, %27 : vector<64x128xf32>
      %31 = vector.shape_cast %30 : vector<64x128xf32> to vector<4x16x128xf32>
      %cst_22 = arith.constant dense<0.000000e+00> : vector<4x128xf32>
      %32 = vector.multi_reduction <add>, %31, %cst_22 [1] : vector<4x16x128xf32> to vector<4x128xf32>
      %33 = vector.shape_cast %32 : vector<4x128xf32> to vector<4x1x128xf32>
      %cst_23 = arith.constant 1.600000e+01 : f32
      %34 = vector.broadcast %cst_23 : f32 to vector<4x1x128xf32>
      %35 = arith.divf %33, %34 : vector<4x1x128xf32>
      %36 = arith.mulf %31, %31 : vector<4x16x128xf32>
      %cst_24 = arith.constant dense<0.000000e+00> : vector<4x128xf32>
      %37 = vector.multi_reduction <add>, %36, %cst_24 [1] : vector<4x16x128xf32> to vector<4x128xf32>
      %38 = vector.shape_cast %37 : vector<4x128xf32> to vector<4x1x128xf32>
      %cst_25 = arith.constant 1.600000e+01 : f32
      %39 = vector.broadcast %cst_25 : f32 to vector<4x1x128xf32>
      %40 = arith.divf %38, %39 : vector<4x1x128xf32>
      %41 = arith.mulf %35, %35 : vector<4x1x128xf32>
      %42 = arith.subf %40, %41 : vector<4x1x128xf32>
      %43 = vector.broadcast %35 : vector<4x1x128xf32> to vector<4x16x128xf32>
      %44 = arith.subf %31, %43 : vector<4x16x128xf32>
      %cst_26 = arith.constant 9.99999974E-6 : f32
      %45 = vector.broadcast %cst_26 : f32 to vector<4x1x128xf32>
      %46 = arith.addf %42, %45 : vector<4x1x128xf32>
      %47 = math.rsqrt %46 : vector<4x1x128xf32>
      %48 = vector.broadcast %47 : vector<4x1x128xf32> to vector<4x16x128xf32>
      %49 = arith.mulf %44, %48 : vector<4x16x128xf32>
      %50 = vector.shape_cast %49 : vector<4x16x128xf32> to vector<64x128xf32>
      %c0_27 = arith.constant 0 : index
      %c0_28 = arith.constant 0 : index
      %51 = vector.load %arg6[%c0_27, %c0_28] : memref<1x128xf32, #tpu.memory_space<vmem>>, vector<1x128xf32>
      %52 = vector.broadcast %51 : vector<1x128xf32> to vector<64x128xf32>
      %53 = arith.mulf %50, %52 : vector<64x128xf32>
      %c0_29 = arith.constant 0 : index
      %c0_30 = arith.constant 0 : index
      %54 = vector.load %arg7[%c0_29, %c0_30] : memref<1x128xf32, #tpu.memory_space<vmem>>, vector<1x128xf32>
      %55 = vector.broadcast %54 : vector<1x128xf32> to vector<64x128xf32>
      %56 = arith.addf %53, %55 : vector<64x128xf32>
      %57 = arith.truncf %56 : vector<64x128xf32> to vector<64x128xbf16>
      %c0_31 = arith.constant 0 : index
      %c0_32 = arith.constant 0 : index
      %58 = vector.load %arg8[%c0_31, %c0_32] : memref<128x512xbf16, #tpu.memory_space<vmem>>, vector<128x512xbf16>
      %cst_33 = arith.constant dense<0.000000e+00> : vector<64x512xf32>
      %59 = tpu.matmul %57, %58, %cst_33 {dimension_numbers = #tpu.dot_dimension_numbers<[1], [0], [0], [1], [0, 0, 1, 1], [], []>} : vector<64x128xbf16>, vector<128x512xbf16>, vector<64x512xf32> -> vector<64x512xf32>
      %c0_34 = arith.constant 0 : index
      %c0_35 = arith.constant 0 : index
      %60 = vector.load %arg9[%c0_34, %c0_35] : memref<1x512xf32, #tpu.memory_space<vmem>>, vector<1x512xf32>
      %61 = vector.broadcast %60 : vector<1x512xf32> to vector<64x512xf32>
      %62 = arith.addf %59, %61 : vector<64x512xf32>
      %cst_36 = arith.constant 0.000000e+00 : f32
      %63 = vector.broadcast %cst_36 : f32 to vector<64x512xf32>
      %64 = arith.maximumf %62, %63 : vector<64x512xf32>
      %65 = arith.truncf %64 : vector<64x512xf32> to vector<64x512xbf16>
      %c0_37 = arith.constant 0 : index
      %c0_38 = arith.constant 0 : index
      %66 = vector.load %arg10[%c0_37, %c0_38] : memref<512x128xbf16, #tpu.memory_space<vmem>>, vector<512x128xbf16>
      %cst_39 = arith.constant dense<0.000000e+00> : vector<64x128xf32>
      %67 = tpu.matmul %65, %66, %cst_39 {dimension_numbers = #tpu.dot_dimension_numbers<[1], [0], [0], [1], [0, 0, 1, 1], [], []>} : vector<64x512xbf16>, vector<512x128xbf16>, vector<64x128xf32> -> vector<64x128xf32>
      %c0_40 = arith.constant 0 : index
      %c0_41 = arith.constant 0 : index
      %68 = vector.load %arg11[%c0_40, %c0_41] : memref<1x128xf32, #tpu.memory_space<vmem>>, vector<1x128xf32>
      %69 = vector.broadcast %68 : vector<1x128xf32> to vector<64x128xf32>
      %70 = arith.addf %67, %69 : vector<64x128xf32>
      %71 = arith.addf %56, %70 : vector<64x128xf32>
      %72 = vector.shape_cast %71 : vector<64x128xf32> to vector<4x16x128xf32>
      %cst_42 = arith.constant dense<0.000000e+00> : vector<4x128xf32>
      %73 = vector.multi_reduction <add>, %72, %cst_42 [1] : vector<4x16x128xf32> to vector<4x128xf32>
      %74 = vector.shape_cast %73 : vector<4x128xf32> to vector<4x1x128xf32>
      %cst_43 = arith.constant 1.600000e+01 : f32
      %75 = vector.broadcast %cst_43 : f32 to vector<4x1x128xf32>
      %76 = arith.divf %74, %75 : vector<4x1x128xf32>
      %77 = arith.mulf %72, %72 : vector<4x16x128xf32>
      %cst_44 = arith.constant dense<0.000000e+00> : vector<4x128xf32>
      %78 = vector.multi_reduction <add>, %77, %cst_44 [1] : vector<4x16x128xf32> to vector<4x128xf32>
      %79 = vector.shape_cast %78 : vector<4x128xf32> to vector<4x1x128xf32>
      %cst_45 = arith.constant 1.600000e+01 : f32
      %80 = vector.broadcast %cst_45 : f32 to vector<4x1x128xf32>
      %81 = arith.divf %79, %80 : vector<4x1x128xf32>
      %82 = arith.mulf %76, %76 : vector<4x1x128xf32>
      %83 = arith.subf %81, %82 : vector<4x1x128xf32>
      %84 = vector.broadcast %76 : vector<4x1x128xf32> to vector<4x16x128xf32>
      %85 = arith.subf %72, %84 : vector<4x16x128xf32>
      %cst_46 = arith.constant 9.99999974E-6 : f32
      %86 = vector.broadcast %cst_46 : f32 to vector<4x1x128xf32>
      %87 = arith.addf %83, %86 : vector<4x1x128xf32>
      %88 = math.rsqrt %87 : vector<4x1x128xf32>
      %89 = vector.broadcast %88 : vector<4x1x128xf32> to vector<4x16x128xf32>
      %90 = arith.mulf %85, %89 : vector<4x16x128xf32>
      %c0_47 = arith.constant 0 : index
      %c0_48 = arith.constant 0 : index
      %91 = vector.load %arg12[%c0_47, %c0_48] : memref<1x128xf32, #tpu.memory_space<vmem>>, vector<1x128xf32>
      %92 = vector.shape_cast %91 : vector<1x128xf32> to vector<1x1x128xf32>
      %93 = vector.broadcast %92 : vector<1x1x128xf32> to vector<4x16x128xf32>
      %94 = arith.mulf %90, %93 : vector<4x16x128xf32>
      %c0_49 = arith.constant 0 : index
      %c0_50 = arith.constant 0 : index
      %95 = vector.load %arg13[%c0_49, %c0_50] : memref<1x128xf32, #tpu.memory_space<vmem>>, vector<1x128xf32>
      %96 = vector.shape_cast %95 : vector<1x128xf32> to vector<1x1x128xf32>
      %97 = vector.broadcast %96 : vector<1x1x128xf32> to vector<4x16x128xf32>
      %98 = arith.addf %94, %97 : vector<4x16x128xf32>
      %c0_51 = arith.constant 0 : index
      %c0_52 = arith.constant 0 : index
      %c0_53 = arith.constant 0 : index
      %99 = vector.load %arg14[%c0_51, %c0_52, %c0_53] : memref<4x16x128xf32, #tpu.memory_space<vmem>>, vector<4x16x128xf32>
      tpu.vector_store %arg14[%c0_51, %c0_52, %c0_53], %98 {strides = array<i32>} : memref<4x16x128xf32, #tpu.memory_space<vmem>>, vector<4x16x128xf32>,
    } else {
    }
    return
  }
  func.func @transform_0(%arg0: i32, %arg1: i32, %arg2: memref<1xf32, #tpu.memory_space<smem>>) -> (i32, i32, i32) {
    %c0_i32 = arith.constant 0 : i32
    %c0_i32_0 = arith.constant 0 : i32
    %c0_i32_1 = arith.constant 0 : i32
    return %arg0, %c0_i32, %c0_i32_0 : i32, i32, i32
  }
  func.func @transform_1(%arg0: i32, %arg1: i32, %arg2: memref<1xf32, #tpu.memory_space<smem>>) -> (i32, i32, i32) {
    %c0_i32 = arith.constant 0 : i32
    %c0_i32_0 = arith.constant 0 : i32
    return %arg0, %c0_i32, %arg1 : i32, i32, i32
  }
  func.func @transform_2(%arg0: i32, %arg1: i32, %arg2: memref<1xf32, #tpu.memory_space<smem>>) -> (i32, i32) {
    %c0_i32 = arith.constant 0 : i32
    %c0_i32_0 = arith.constant 0 : i32
    %c0_i32_1 = arith.constant 0 : i32
    return %c0_i32, %c0_i32_0 : i32, i32
  }
  func.func @transform_3(%arg0: i32, %arg1: i32, %arg2: memref<1xf32, #tpu.memory_space<smem>>) -> (i32, i32) {
    %c0_i32 = arith.constant 0 : i32
    %c0_i32_0 = arith.constant 0 : i32
    %c0_i32_1 = arith.constant 0 : i32
    return %c0_i32, %c0_i32_0 : i32, i32
  }
  func.func @transform_4(%arg0: i32, %arg1: i32, %arg2: memref<1xf32, #tpu.memory_space<smem>>) -> (i32, i32) {
    %c0_i32 = arith.constant 0 : i32
    %c0_i32_0 = arith.constant 0 : i32
    %c0_i32_1 = arith.constant 0 : i32
    return %c0_i32, %c0_i32_0 : i32, i32
  }
  func.func @transform_5(%arg0: i32, %arg1: i32, %arg2: memref<1xf32, #tpu.memory_space<smem>>) -> (i32, i32) {
    %c0_i32 = arith.constant 0 : i32
    %c0_i32_0 = arith.constant 0 : i32
    %c0_i32_1 = arith.constant 0 : i32
    return %c0_i32, %c0_i32_0 : i32, i32
  }
  func.func @transform_6(%arg0: i32, %arg1: i32, %arg2: memref<1xf32, #tpu.memory_space<smem>>) -> (i32, i32) {
    %c0_i32 = arith.constant 0 : i32
    %c0_i32_0 = arith.constant 0 : i32
    %c0_i32_1 = arith.constant 0 : i32
    return %c0_i32, %c0_i32_0 : i32, i32
  }
  func.func @transform_7(%arg0: i32, %arg1: i32, %arg2: memref<1xf32, #tpu.memory_space<smem>>) -> (i32, i32) {
    %c0_i32 = arith.constant 0 : i32
    %c0_i32_0 = arith.constant 0 : i32
    %c0_i32_1 = arith.constant 0 : i32
    return %c0_i32, %c0_i32_0 : i32, i32
  }
  func.func @transform_8(%arg0: i32, %arg1: i32, %arg2: memref<1xf32, #tpu.memory_space<smem>>) -> (i32, i32) {
    %c0_i32 = arith.constant 0 : i32
    %c0_i32_0 = arith.constant 0 : i32
    %c0_i32_1 = arith.constant 0 : i32
    return %c0_i32, %c0_i32_0 : i32, i32
  }
  func.func @transform_9(%arg0: i32, %arg1: i32, %arg2: memref<1xf32, #tpu.memory_space<smem>>) -> (i32, i32) {
    %c0_i32 = arith.constant 0 : i32
    %c0_i32_0 = arith.constant 0 : i32
    %c0_i32_1 = arith.constant 0 : i32
    return %c0_i32, %c0_i32_0 : i32, i32
  }
  func.func @transform_10(%arg0: i32, %arg1: i32, %arg2: memref<1xf32, #tpu.memory_space<smem>>) -> (i32, i32) {
    %c0_i32 = arith.constant 0 : i32
    %c0_i32_0 = arith.constant 0 : i32
    %c0_i32_1 = arith.constant 0 : i32
    return %c0_i32, %c0_i32_0 : i32, i32
  }
  func.func @transform_11(%arg0: i32, %arg1: i32, %arg2: memref<1xf32, #tpu.memory_space<smem>>) -> (i32, i32, i32) {
    %c0_i32 = arith.constant 0 : i32
    %c0_i32_0 = arith.constant 0 : i32
    %c0_i32_1 = arith.constant 0 : i32
    return %arg0, %c0_i32, %c0_i32_0 : i32, i32, i32
  }
}

</mosaic_0001>

<llo_original>
// kernel: tpu_custom_call.1
$region0: #{tpu_custom_call.1}
  #allocation0 [shape = 'u32[]', space=smem, size = 0x4, offset = 0x4, fixed_abs, tag = 'smem constant byte address 0x4 - core index']
  #allocation1 [shape = 'u32[144,128]{1,0:T(1,128)}', space=vmem, size = 0x12000, scoped, tag = 'internal scratch']
  #allocation2 [shape = 'f32[64,128]{1,0:T(8,128)}', space=vmem, size = 0x8000, scoped, tag = 'scratch operand']
  #allocation3 [shape = 'bf16[4,16,256]{2,1,0:T(8,128)(2,1)}', space=vmem, size = 0x8000, scoped, tag = 'scratch operand']
  #allocation4 [shape = 'f32[4,16,256]{2,1,0:T(8,128)}', space=vmem, size = 0x10000, scoped, tag = 'scratch operand']
  #allocation5 [shape = 's32[1]{0}', space=sflag, size = 0x4, scoped, tag = 'scoped memory for tpu_custom_call.1']
  #allocation6 [shape = 'f32[1]{0:T(128)S(6)}', space=smem, size = 0x200, scoped, tag = 'prefetched SMEM operand 0']
  %s0 = inlined_call_operand.<no memory space> [shape: f32[1], index: 0, kind: input, shape index: {}]
  %s1 = inlined_call_operand.hbm [shape: f32[8,16,128], index: 1, kind: input, shape index: {}]
  %s2 = inlined_call_operand.hbm [shape: bf16[8,16,16], index: 2, kind: input, shape index: {}]
  %s3 = inlined_call_operand.hbm [shape: bf16[128,384], index: 3, kind: input, shape index: {}]
  %s4 = inlined_call_operand.vmem [shape: f32[1,128], index: 4, kind: input, shape index: {}]
  %s5 = inlined_call_operand.vmem [shape: f32[1,128], index: 5, kind: input, shape index: {}]
  %s6 = inlined_call_operand.hbm [shape: bf16[128,512], index: 6, kind: input, shape index: {}]
  %s7 = inlined_call_operand.vmem [shape: f32[1,512], index: 7, kind: input, shape index: {}]
  %s8 = inlined_call_operand.hbm [shape: bf16[512,128], index: 8, kind: input, shape index: {}]
  %s9 = inlined_call_operand.vmem [shape: f32[1,128], index: 9, kind: input, shape index: {}]
  %s10 = inlined_call_operand.vmem [shape: f32[1,128], index: 10, kind: input, shape index: {}]
  %s11 = inlined_call_operand.vmem [shape: f32[1,128], index: 11, kind: input, shape index: {}]
  %s12 = inlined_call_operand.hbm [shape: f32[8,16,128], index: 12, kind: output, shape index: {}]
  %s13 = sld [smem:[#allocation0]]
  $region105: #{tpu_custom_call.1} parent=0
    _
  %s15 = ssub.s32 1, %s13
  %s16 = scalar_select 0, %s15, %s13
  %17 = sst [smem:[#allocation6]] %s0
  $region1: #{tpu_custom_call.1} parent=0
    #allocation7 [shape = 'u8[65536]{0}', space=vmem, size = 0x10000, scoped, tag = 'input window, operand 1']
    #allocation8 [shape = 's32[2]{0}', space=sflag, size = 0x8, scoped, tag = 'scoped memory for tpu_custom_call.1']
    #allocation9 [shape = 's32[2]{0}', space=sflag, size = 0x8, scoped, tag = 'scoped memory for tpu_custom_call.1']
    #allocation10 [shape = 'u8[32768]{0}', space=vmem, size = 0x8000, scoped, tag = 'input window, operand 2']
    #allocation11 [shape = 's32[2]{0}', space=sflag, size = 0x8, scoped, tag = 'scoped memory for tpu_custom_call.1']
    #allocation12 [shape = 'u8[98304]{0}', space=vmem, size = 0x18000, scoped, tag = 'input window, operand 3, single buffered']
    #allocation13 [shape = 'u8[131072]{0}', space=vmem, size = 0x20000, scoped, tag = 'input window, operand 6, single buffered']
    #allocation14 [shape = 's32[1]{0}', space=sflag, size = 0x4, scoped, tag = 'scoped memory for tpu_custom_call.1']
    #allocation15 [shape = 'u8[131072]{0}', space=vmem, size = 0x20000, scoped, tag = 'input window, operand 8, single buffered']
    #allocation16 [shape = 'u8[65536]{0}', space=vmem, size = 0x10000, scoped, tag = 'output window, operand 0']
    %18 = vsyncpa [#allocation8], 0
    %s19 = scalar_lea.sflag [#allocation8], 1
    %20 = vsyncpa %s19, 0
    %21 = vsyncpa [#allocation11], 0
    %s22 = scalar_lea.sflag [#allocation11], 1
    %23 = vsyncpa %s22, 0
    %24 = vsyncpa [#allocation14], 0
    %25 = vsyncpa [#allocation9], 0
    %s26 = scalar_lea.sflag [#allocation9], 1
    %27 = vsyncpa %s26, 0
    loop: start=0, step=1, limit=4
    $region2: #{tpu_custom_call.1} parent=1 // loop_pre_header
      _
    $region3: #{tpu_custom_call.1} parent=1 // loop_header
      %s29 = sphi 0, %s33
      %p30 = scmp.ge.s32.totalorder %s29, 4
      %s36 = sphi 0, %s48
      %s37 = sphi 0, %s44
      %s38 = sphi 0, %s36
      %s39 = sphi 0, %s37
      %s40 = sphi 0, %s38
      %s41 = sphi 0, %s39
      %s51 = sphi 0, %s53
      %s54 = sphi 0, %s51
      %s55 = sphi 0, %s54
      %s71 = sphi 0, %s55
      %s79 = sphi 0, %s81
      %s82 = sphi 0, %s79
      %s83 = sphi 0, %s82
      %s99 = sphi 0, %s83
      %s103 = sphi 0, %s103
      %s105 = sphi 0, %s103
      %s106 = sphi 0, %s105
      %s120 = sphi 0, %s106
      %s124 = sphi 0, %s124
      %s126 = sphi 0, %s124
      %s127 = sphi 0, %s126
      %s141 = sphi 0, %s127
      %s145 = sphi 0, %s145
      %s147 = sphi 0, %s145
      %s148 = sphi 0, %s147
      %s162 = sphi 0, %s148
      %s166 = sphi 0, %s166
      %s168 = sphi 0, %s166
      %s169 = sphi 0, %s168
      %s183 = sphi 0, %s169
      %s187 = sphi 0, %s187
      %s189 = sphi 0, %s187
      %s190 = sphi 0, %s189
      %s204 = sphi 0, %s190
      %s208 = sphi 0, %s208
      %s210 = sphi 0, %s208
      %s211 = sphi 0, %s210
      %s225 = sphi 0, %s211
      %s229 = sphi 0, %s229
      %s231 = sphi 0, %s229
      %s232 = sphi 0, %s231
      %s246 = sphi 0, %s232
      %s250 = sphi 0, %s250
      %s252 = sphi 0, %s250
      %s253 = sphi 0, %s252
      %s267 = sphi 0, %s253
      %s271 = sphi 0, %s271
      %s273 = sphi 0, %s271
      %s274 = sphi 0, %s273
      %s288 = sphi 0, %s274
      %s294 = sphi 0, %s296
      %s297 = sphi 0, %s294
      %s298 = sphi 0, %s297
      %s314 = sphi 0, %s298
    $region4: #{tpu_custom_call.1} parent=1 // loop_header_branch
      %32 = sbr.rel (%p30) target = $region8
    $region5: #{tpu_custom_call.1} parent=1 // loop_body
      %s34 = ssub.s32 %s29, 1
      %s35 = ssub.s32 %s29, 2
      %s42 = sadd.s32 1, %s37
      %p43 = scmp.ge.s32.totalorder %s42, 1
      %s44 = scalar_select %p43, 0, %s42
      %s45 = sadd.s32 1, %s36
      %s46 = scalar_select %p43, %s45, %s36
      %p47 = scmp.ge.s32.totalorder %s46, 2
      %s48 = scalar_select %p47, 0, %s46
      %s49 = ssub.s32 %s36, %s48
      %p50 = scmp.eq.s32.totalorder %s49, 0
      %s52 = sadd.s32 %s51, 1
      %s53 = scalar_select %p50, %s51, %s52
      %p56 = pneg %p50
      %p57 = scmp.eq.s32.totalorder %s29, 1
      %p58 = por %p56, %p57
      %p59 = scmp.ne.s32.totalorder %s51, %s54
      %p60 = scmp.eq.s32.totalorder %s29, 0
      %p61 = por %p59, %p60
      %p62 = scmp.ne.s32.totalorder %s51, %s54
      %p63 = scmp.eq.s32.totalorder %s34, 1
      %p64 = por %p62, %p63
      %p65 = scmp.ne.s32.totalorder %s54, %s55
      %p66 = scmp.eq.s32.totalorder %s34, 0
      %p67 = por %p65, %p66
      %p68 = scmp.ne.s32.totalorder %s54, %s55
      %p69 = scmp.eq.s32.totalorder %s35, 1
      %p70 = por %p68, %p69
      %p72 = scmp.ne.s32.totalorder %s55, %s71
      %p73 = scmp.eq.s32.totalorder %s35, 0
      %p74 = por %p72, %p73
      %s75 = ssub.s32 %s36, %s48
      %s76 = ssub.s32 %s37, %s44
      %s77 = sor.u32 %s75, %s76
      %p78 = scmp.eq.s32.totalorder %s77, 0
      %s80 = sadd.s32 %s79, 1
      %s81 = scalar_select %p78, %s79, %s80
      %p84 = pneg %p78
      %p85 = scmp.eq.s32.totalorder %s29, 1
      %p86 = por %p84, %p85
      %p87 = scmp.ne.s32.totalorder %s79, %s82
      %p88 = scmp.eq.s32.totalorder %s29, 0
      %p89 = por %p87, %p88
      %p90 = scmp.ne.s32.totalorder %s79, %s82
      %p91 = scmp.eq.s32.totalorder %s34, 1
      %p92 = por %p90, %p91
      %p93 = scmp.ne.s32.totalorder %s82, %s83
      %p94 = scmp.eq.s32.totalorder %s34, 0
      %p95 = por %p93, %p94
      %p96 = scmp.ne.s32.totalorder %s82, %s83
      %p97 = scmp.eq.s32.totalorder %s35, 1
      %p98 = por %p96, %p97
      %p100 = scmp.ne.s32.totalorder %s83, %s99
      %p101 = scmp.eq.s32.totalorder %s35, 0
      %p102 = por %p100, %p101
      %s104 = sadd.s32 %s103, 1
      %p107 = scmp.eq.s32.totalorder %s29, 1
      %p108 = scmp.ne.s32.totalorder %s103, %s105
      %p109 = scmp.eq.s32.totalorder %s29, 0
      %p110 = por %p108, %p109
      %p111 = scmp.ne.s32.totalorder %s103, %s105
      %p112 = scmp.eq.s32.totalorder %s34, 1
      %p113 = por %p111, %p112
      %p114 = scmp.ne.s32.totalorder %s105, %s106
      %p115 = scmp.eq.s32.totalorder %s34, 0
      %p116 = por %p114, %p115
      %p117 = scmp.ne.s32.totalorder %s105, %s106
      %p118 = scmp.eq.s32.totalorder %s35, 1
      %p119 = por %p117, %p118
      %p121 = scmp.ne.s32.totalorder %s106, %s120
      %p122 = scmp.eq.s32.totalorder %s35, 0
      %p123 = por %p121, %p122
      %s125 = sadd.s32 %s124, 1
      %p128 = scmp.eq.s32.totalorder %s29, 1
      %p129 = scmp.ne.s32.totalorder %s124, %s126
      %p130 = scmp.eq.s32.totalorder %s29, 0
      %p131 = por %p129, %p130
      %p132 = scmp.ne.s32.totalorder %s124, %s126
      %p133 = scmp.eq.s32.totalorder %s34, 1
      %p134 = por %p132, %p133
      %p135 = scmp.ne.s32.totalorder %s126, %s127
      %p136 = scmp.eq.s32.totalorder %s34, 0
      %p137 = por %p135, %p136
      %p138 = scmp.ne.s32.totalorder %s126, %s127
      %p139 = scmp.eq.s32.totalorder %s35, 1
      %p140 = por %p138, %p139
      %p142 = scmp.ne.s32.totalorder %s127, %s141
      %p143 = scmp.eq.s32.totalorder %s35, 0
      %p144 = por %p142, %p143
      %s146 = sadd.s32 %s145, 1
      %p149 = scmp.eq.s32.totalorder %s29, 1
      %p150 = scmp.ne.s32.totalorder %s145, %s147
      %p151 = scmp.eq.s32.totalorder %s29, 0
      %p152 = por %p150, %p151
      %p153 = scmp.ne.s32.totalorder %s145, %s147
      %p154 = scmp.eq.s32.totalorder %s34, 1
      %p155 = por %p153, %p154
      %p156 = scmp.ne.s32.totalorder %s147, %s148
      %p157 = scmp.eq.s32.totalorder %s34, 0
      %p158 = por %p156, %p157
      %p159 = scmp.ne.s32.totalorder %s147, %s148
      %p160 = scmp.eq.s32.totalorder %s35, 1
      %p161 = por %p159, %p160
      %p163 = scmp.ne.s32.totalorder %s148, %s162
      %p164 = scmp.eq.s32.totalorder %s35, 0
      %p165 = por %p163, %p164
      %s167 = sadd.s32 %s166, 1
      %p170 = scmp.eq.s32.totalorder %s29, 1
      %p171 = scmp.ne.s32.totalorder %s166, %s168
      %p172 = scmp.eq.s32.totalorder %s29, 0
      %p173 = por %p171, %p172
      %p174 = scmp.ne.s32.totalorder %s166, %s168
      %p175 = scmp.eq.s32.totalorder %s34, 1
      %p176 = por %p174, %p175
      %p177 = scmp.ne.s32.totalorder %s168, %s169
      %p178 = scmp.eq.s32.totalorder %s34, 0
      %p179 = por %p177, %p178
      %p180 = scmp.ne.s32.totalorder %s168, %s169
      %p181 = scmp.eq.s32.totalorder %s35, 1
      %p182 = por %p180, %p181
      %p184 = scmp.ne.s32.totalorder %s169, %s183
      %p185 = scmp.eq.s32.totalorder %s35, 0
      %p186 = por %p184, %p185
      %s188 = sadd.s32 %s187, 1
      %p191 = scmp.eq.s32.totalorder %s29, 1
      %p192 = scmp.ne.s32.totalorder %s187, %s189
      %p193 = scmp.eq.s32.totalorder %s29, 0
      %p194 = por %p192, %p193
      %p195 = scmp.ne.s32.totalorder %s187, %s189
      %p196 = scmp.eq.s32.totalorder %s34, 1
      %p197 = por %p195, %p196
      %p198 = scmp.ne.s32.totalorder %s189, %s190
      %p199 = scmp.eq.s32.totalorder %s34, 0
      %p200 = por %p198, %p199
      %p201 = scmp.ne.s32.totalorder %s189, %s190
      %p202 = scmp.eq.s32.totalorder %s35, 1
      %p203 = por %p201, %p202
      %p205 = scmp.ne.s32.totalorder %s190, %s204
      %p206 = scmp.eq.s32.totalorder %s35, 0
      %p207 = por %p205, %p206
      %s209 = sadd.s32 %s208, 1
      %p212 = scmp.eq.s32.totalorder %s29, 1
      %p213 = scmp.ne.s32.totalorder %s208, %s210
      %p214 = scmp.eq.s32.totalorder %s29, 0
      %p215 = por %p213, %p214
      %p216 = scmp.ne.s32.totalorder %s208, %s210
      %p217 = scmp.eq.s32.totalorder %s34, 1
      %p218 = por %p216, %p217
      %p219 = scmp.ne.s32.totalorder %s210, %s211
      %p220 = scmp.eq.s32.totalorder %s34, 0
      %p221 = por %p219, %p220
      %p222 = scmp.ne.s32.totalorder %s210, %s211
      %p223 = scmp.eq.s32.totalorder %s35, 1
      %p224 = por %p222, %p223
      %p226 = scmp.ne.s32.totalorder %s211, %s225
      %p227 = scmp.eq.s32.totalorder %s35, 0
      %p228 = por %p226, %p227
      %s230 = sadd.s32 %s229, 1
      %p233 = scmp.eq.s32.totalorder %s29, 1
      %p234 = scmp.ne.s32.totalorder %s229, %s231
      %p235 = scmp.eq.s32.totalorder %s29, 0
      %p236 = por %p234, %p235
      %p237 = scmp.ne.s32.totalorder %s229, %s231
      %p238 = scmp.eq.s32.totalorder %s34, 1
      %p239 = por %p237, %p238
      %p240 = scmp.ne.s32.totalorder %s231, %s232
      %p241 = scmp.eq.s32.totalorder %s34, 0
      %p242 = por %p240, %p241
      %p243 = scmp.ne.s32.totalorder %s231, %s232
      %p244 = scmp.eq.s32.totalorder %s35, 1
      %p245 = por %p243, %p244
      %p247 = scmp.ne.s32.totalorder %s232, %s246
      %p248 = scmp.eq.s32.totalorder %s35, 0
      %p249 = por %p247, %p248
      %s251 = sadd.s32 %s250, 1
      %p254 = scmp.eq.s32.totalorder %s29, 1
      %p255 = scmp.ne.s32.totalorder %s250, %s252
      %p256 = scmp.eq.s32.totalorder %s29, 0
      %p257 = por %p255, %p256
      %p258 = scmp.ne.s32.totalorder %s250, %s252
      %p259 = scmp.eq.s32.totalorder %s34, 1
      %p260 = por %p258, %p259
      %p261 = scmp.ne.s32.totalorder %s252, %s253
      %p262 = scmp.eq.s32.totalorder %s34, 0
      %p263 = por %p261, %p262
      %p264 = scmp.ne.s32.totalorder %s252, %s253
      %p265 = scmp.eq.s32.totalorder %s35, 1
      %p266 = por %p264, %p265
      %p268 = scmp.ne.s32.totalorder %s253, %s267
      %p269 = scmp.eq.s32.totalorder %s35, 0
      %p270 = por %p268, %p269
      %s272 = sadd.s32 %s271, 1
      %p275 = scmp.eq.s32.totalorder %s29, 1
      %p276 = scmp.ne.s32.totalorder %s271, %s273
      %p277 = scmp.eq.s32.totalorder %s29, 0
      %p278 = por %p276, %p277
      %p279 = scmp.ne.s32.totalorder %s271, %s273
      %p280 = scmp.eq.s32.totalorder %s34, 1
      %p281 = por %p279, %p280
      %p282 = scmp.ne.s32.totalorder %s273, %s274
      %p283 = scmp.eq.s32.totalorder %s34, 0
      %p284 = por %p282, %p283
      %p285 = scmp.ne.s32.totalorder %s273, %s274
      %p286 = scmp.eq.s32.totalorder %s35, 1
      %p287 = por %p285, %p286
      %p289 = scmp.ne.s32.totalorder %s274, %s288
      %p290 = scmp.eq.s32.totalorder %s35, 0
      %p291 = por %p289, %p290
      %s292 = ssub.s32 %s36, %s48
      %p293 = scmp.eq.s32.totalorder %s292, 0
      %s295 = sadd.s32 %s294, 1
      %s296 = scalar_select %p293, %s294, %s295
      %p299 = pneg %p293
      %p300 = scmp.eq.s32.totalorder %s29, 1
      %p301 = por %p299, %p300
      %p302 = scmp.ne.s32.totalorder %s294, %s297
      %p303 = scmp.eq.s32.totalorder %s29, 0
      %p304 = por %p302, %p303
      %p305 = scmp.ne.s32.totalorder %s294, %s297
      %p306 = scmp.eq.s32.totalorder %s34, 1
      %p307 = por %p305, %p306
      %p308 = scmp.ne.s32.totalorder %s297, %s298
      %p309 = scmp.eq.s32.totalorder %s34, 0
      %p310 = por %p308, %p309
      %p311 = scmp.ne.s32.totalorder %s297, %s298
      %p312 = scmp.eq.s32.totalorder %s35, 1
      %p313 = por %p311, %p312
      %p315 = scmp.ne.s32.totalorder %s298, %s314
      %p316 = scmp.eq.s32.totalorder %s35, 0
      %p317 = por %p315, %p316
      %p318 = scmp.le.s32.totalorder 1, %s29
      %p319 = scmp.lt.s32.totalorder %s29, 3
      %p320 = pnand %p318, %p319
      %p321 = pneg %p320
      // Predicated region
      $region9: #{tpu_custom_call.1} parent=5 // pred_check
        _
      $region10: #{tpu_custom_call.1} parent=5 // pred_check_branch
        %323 = sbr.rel (%p320) target = $region12
      $region11: #{tpu_custom_call.1} parent=5 // pred_region
        %s324 = ssub.s32 %s29, 1
        // Predicated region
        $region13: #{tpu_custom_call.1} parent=11 // pred_check
          %p325 = pneg %p116
        $region14: #{tpu_custom_call.1} parent=11 // pred_check_branch
          %327 = sbr.rel (%p325) target = $region16
        $region15: #{tpu_custom_call.1} parent=11 // pred_region
          %s329 = ssub.s32 3072, 3072
          %330 = vsyncadd [#allocation11], %s329
          %s331 = sshll.u32 [#allocation12], 4
          %s332 = int_to_ptr.vmem [resolvable:$true] %s331
          %337 = dma.hbm_to_vmem [thread:$0]  %s3, 3072, %s332, [#allocation11], 192, 192, 12
        $region16: #{tpu_custom_call.1} parent=11 // pred_fallthru
          _
        // Predicated region
        $region17: #{tpu_custom_call.1} parent=11 // pred_check
          %p338 = pneg %p137
        $region18: #{tpu_custom_call.1} parent=11 // pred_check_branch
          %340 = sbr.rel (%p338) target = $region20
        $region19: #{tpu_custom_call.1} parent=11 // pred_region
          _
        $region20: #{tpu_custom_call.1} parent=11 // pred_fallthru
          _
        // Predicated region
        $region21: #{tpu_custom_call.1} parent=11 // pred_check
          %p341 = pneg %p158
        $region22: #{tpu_custom_call.1} parent=11 // pred_check_branch
          %343 = sbr.rel (%p341) target = $region24
        $region23: #{tpu_custom_call.1} parent=11 // pred_region
          _
        $region24: #{tpu_custom_call.1} parent=11 // pred_fallthru
          _
        // Predicated region
        $region25: #{tpu_custom_call.1} parent=11 // pred_check
          %p344 = pneg %p179
        $region26: #{tpu_custom_call.1} parent=11 // pred_check_branch
          %346 = sbr.rel (%p344) target = $region28
        $region27: #{tpu_custom_call.1} parent=11 // pred_region
          %s348 = ssub.s32 4096, 4096
          %349 = vsyncadd [#allocation14], %s348
          %s350 = sshll.u32 [#allocation13], 4
          %s351 = int_to_ptr.vmem [resolvable:$true] %s350
          %356 = dma.hbm_to_vmem [thread:$0]  %s6, 4096, %s351, [#allocation14], 256, 256, 16
        $region28: #{tpu_custom_call.1} parent=11 // pred_fallthru
          _
        // Predicated region
        $region29: #{tpu_custom_call.1} parent=11 // pred_check
          %p357 = pneg %p200
        $region30: #{tpu_custom_call.1} parent=11 // pred_check_branch
          %359 = sbr.rel (%p357) target = $region32
        $region31: #{tpu_custom_call.1} parent=11 // pred_region
          _
        $region32: #{tpu_custom_call.1} parent=11 // pred_fallthru
          _
        // Predicated region
        $region33: #{tpu_custom_call.1} parent=11 // pred_check
          %p360 = pneg %p221
        $region34: #{tpu_custom_call.1} parent=11 // pred_check_branch
          %362 = sbr.rel (%p360) target = $region36
        $region35: #{tpu_custom_call.1} parent=11 // pred_region
          %s364 = ssub.s32 4096, 4096
          %365 = vsyncadd [#allocation14], %s364
          %s366 = sshll.u32 [#allocation15], 4
          %s367 = int_to_ptr.vmem [resolvable:$true] %s366
          %372 = dma.hbm_to_vmem [thread:$0]  %s8, 4096, %s367, [#allocation14], 64, 64, 4
        $region36: #{tpu_custom_call.1} parent=11 // pred_fallthru
          _
        // Predicated region
        $region37: #{tpu_custom_call.1} parent=11 // pred_check
          %p373 = pneg %p242
        $region38: #{tpu_custom_call.1} parent=11 // pred_check_branch
          %375 = sbr.rel (%p373) target = $region40
        $region39: #{tpu_custom_call.1} parent=11 // pred_region
          _
        $region40: #{tpu_custom_call.1} parent=11 // pred_fallthru
          _
        // Predicated region
        $region41: #{tpu_custom_call.1} parent=11 // pred_check
          %p376 = pneg %p263
        $region42: #{tpu_custom_call.1} parent=11 // pred_check_branch
          %378 = sbr.rel (%p376) target = $region44
        $region43: #{tpu_custom_call.1} parent=11 // pred_region
          _
        $region44: #{tpu_custom_call.1} parent=11 // pred_fallthru
          _
        // Predicated region
        $region45: #{tpu_custom_call.1} parent=11 // pred_check
          %p379 = pneg %p284
        $region46: #{tpu_custom_call.1} parent=11 // pred_check_branch
          %381 = sbr.rel (%p379) target = $region48
        $region47: #{tpu_custom_call.1} parent=11 // pred_region
          _
        $region48: #{tpu_custom_call.1} parent=11 // pred_fallthru
          _
      $region12: #{tpu_custom_call.1} parent=5 // pred_fallthru
        _
      %p382 = scmp.lt.s32.totalorder %s29, 2
      // Predicated region
      $region49: #{tpu_custom_call.1} parent=5 // pred_check
        %p383 = pneg %p382
      $region50: #{tpu_custom_call.1} parent=5 // pred_check_branch
        %385 = sbr.rel (%p383) target = $region52
      $region51: #{tpu_custom_call.1} parent=5 // pred_region
        // Predicated region
        $region53: #{tpu_custom_call.1} parent=51 // pred_check
          %p386 = pneg %p61
        $region54: #{tpu_custom_call.1} parent=51 // pred_check_branch
          %388 = sbr.rel (%p386) target = $region56
        $region55: #{tpu_custom_call.1} parent=51 // pred_region
          %s389 = sand.u32 %s51, 1
          %s390 = scalar_lea.sflag [#allocation8], %s389
          %s391 = sand.u32 %s51, 1
          %s392 = smul.addr %s391, 64
          %s393 = scalar_lea.vmem [#allocation7], %s392
          %s394 = smul.u32 4, %s36
          %s396 = ssub.s32 1024, 1024
          %397 = vsyncadd %s390, %s396
          %s398 = smul.addr %s394, 2
          %s399 = smul.addr %s398, 128
          %s400 = scalar_lea.hbm %s1, %s399
          %s401 = sshll.u32 %s393, 4
          %s402 = int_to_ptr.vmem [resolvable:$true] %s401
          %407 = dma.hbm_to_vmem [thread:$0]  %s400, 1024, %s402, %s390, 128, 128, 8
        $region56: #{tpu_custom_call.1} parent=51 // pred_fallthru
          _
        // Predicated region
        $region57: #{tpu_custom_call.1} parent=51 // pred_check
          %p408 = pneg %p89
        $region58: #{tpu_custom_call.1} parent=51 // pred_check_branch
          %410 = sbr.rel (%p408) target = $region60
        $region59: #{tpu_custom_call.1} parent=51 // pred_region
          %s411 = sand.u32 %s29, 1
          %s412 = scalar_lea.sflag [#allocation11], %s411
          %s413 = sand.u32 %s79, 1
          %s414 = smul.addr %s413, 32
          %s415 = scalar_lea.vmem [#allocation10], %s414
          %s416 = smul.u32 4, %s36
          %s418 = ssub.s32 512, 512
          %419 = vsyncadd %s412, %s418
          %s420 = smul.addr %s416, 2
          %s421 = sadd.s32 %s37, %s420
          %s422 = smul.addr %s421, 64
          %s423 = scalar_lea.hbm %s2, %s422
          %s424 = sshll.u32 %s415, 4
          %s425 = int_to_ptr.vmem [resolvable:$true] %s424
          %430 = dma.hbm_to_vmem [thread:$0]  %s423, 512, %s425, %s412, 64, 64, 4
        $region60: #{tpu_custom_call.1} parent=51 // pred_fallthru
          _
      $region52: #{tpu_custom_call.1} parent=5 // pred_fallthru
        _
      %p431 = scmp.le.s32.totalorder 1, %s29
      %p432 = scmp.lt.s32.totalorder %s29, 3
      %p433 = pnand %p431, %p432
      %p434 = pneg %p433
      // Predicated region
      $region61: #{tpu_custom_call.1} parent=5 // pred_check
        _
      $region62: #{tpu_custom_call.1} parent=5 // pred_check_branch
        %436 = sbr.rel (%p433) target = $region64
      $region63: #{tpu_custom_call.1} parent=5 // pred_region
        %s437 = ssub.s32 %s29, 1
        %s438 = sand.u32 %s54, 1
        %s439 = scalar_lea.sflag [#allocation8], %s438
        %s440 = sand.u32 %s54, 1
        %s441 = smul.addr %s440, 64
        %s442 = scalar_lea.vmem [#allocation7], %s441
        // Predicated region
        $region65: #{tpu_custom_call.1} parent=63 // pred_check
          %p443 = pneg %p67
        $region66: #{tpu_custom_call.1} parent=63 // pred_check_branch
          %445 = sbr.rel (%p443) target = $region68
        $region67: #{tpu_custom_call.1} parent=63 // pred_region
          %446 = dma.done %s439, 1024
        $region68: #{tpu_custom_call.1} parent=63 // pred_fallthru
          _
        %s447 = sand.u32 %s34, 1
        %s448 = scalar_lea.sflag [#allocation11], %s447
        %s449 = sand.u32 %s82, 1
        %s450 = smul.addr %s449, 32
        %s451 = scalar_lea.vmem [#allocation10], %s450
        // Predicated region
        $region69: #{tpu_custom_call.1} parent=63 // pred_check
          %p452 = pneg %p95
        $region70: #{tpu_custom_call.1} parent=63 // pred_check_branch
          %454 = sbr.rel (%p452) target = $region72
        $region71: #{tpu_custom_call.1} parent=63 // pred_region
          %455 = dma.done %s448, 512
        $region72: #{tpu_custom_call.1} parent=63 // pred_fallthru
          _
        // Predicated region
        $region73: #{tpu_custom_call.1} parent=63 // pred_check
          %p456 = pneg %p116
        $region74: #{tpu_custom_call.1} parent=63 // pred_check_branch
          %458 = sbr.rel (%p456) target = $region76
        $region75: #{tpu_custom_call.1} parent=63 // pred_region
          %459 = dma.done [#allocation11], 3072
        $region76: #{tpu_custom_call.1} parent=63 // pred_fallthru
          _
        // Predicated region
        $region77: #{tpu_custom_call.1} parent=63 // pred_check
          %p460 = pneg %p179
        $region78: #{tpu_custom_call.1} parent=63 // pred_check_branch
          %462 = sbr.rel (%p460) target = $region80
        $region79: #{tpu_custom_call.1} parent=63 // pred_region
          %463 = dma.done [#allocation14], 4096
        $region80: #{tpu_custom_call.1} parent=63 // pred_fallthru
          _
        // Predicated region
        $region81: #{tpu_custom_call.1} parent=63 // pred_check
          %p464 = pneg %p221
        $region82: #{tpu_custom_call.1} parent=63 // pred_check_branch
          %466 = sbr.rel (%p464) target = $region84
        $region83: #{tpu_custom_call.1} parent=63 // pred_region
          %467 = dma.done [#allocation14], 4096
        $region84: #{tpu_custom_call.1} parent=63 // pred_fallthru
          _
        %s468 = sand.u32 %s54, 1
        %s469 = scalar_lea.sflag [#allocation8], %s468
        %s470 = sand.u32 %s54, 1
        %s471 = smul.addr %s470, 64
        %s472 = scalar_lea.vmem [#allocation7], %s471
        %p473 = pneg %p67
        %p474 = pneg %p64
        %s475 = sand.u32 %s34, 1
        %s476 = scalar_lea.sflag [#allocation11], %s475
        %s477 = sand.u32 %s82, 1
        %s478 = smul.addr %s477, 32
        %s479 = scalar_lea.vmem [#allocation10], %s478
        %p480 = pneg %p95
        %p481 = pneg %p92
        %p482 = pneg %p116
        %p483 = pneg %p113
        %p484 = pneg %p137
        %p485 = pneg %p134
        %p486 = pneg %p158
        %p487 = pneg %p155
        %p488 = pneg %p179
        %p489 = pneg %p176
        %p490 = pneg %p200
        %p491 = pneg %p197
        %p492 = pneg %p221
        %p493 = pneg %p218
        %p494 = pneg %p242
        %p495 = pneg %p239
        %p496 = pneg %p263
        %p497 = pneg %p260
        %p498 = pneg %p284
        %p499 = pneg %p281
        %p500 = pneg %p310
        %p501 = pneg %p307
        %s502 = sand.u32 %s297, 1
        %s503 = scalar_lea.sflag [#allocation9], %s502
        %s504 = sand.u32 %s297, 1
        %s505 = smul.addr %s504, 64
        %s506 = scalar_lea.vmem [#allocation16], %s505
        %s507 = smul.u32 4, %s38
        %s508 = smul.u32 4, %s38
        %s509 = smul.u32 4, %s38
        %p511 = scmp.eq.s32.totalorder %s39, 0
        // Predicated region
        $region85: #{tpu_custom_call.1} parent=63 // pred_check
          %p512 = pneg %p511
        $region86: #{tpu_custom_call.1} parent=63 // pred_check_branch
          %514 = sbr.rel (%p512) target = $region88
        $region87: #{tpu_custom_call.1} parent=63 // pred_region
          %v515 = vld [vmem:[%s442] sm:$0xff]
          %v516 = vld [vmem:[%s442 + $0x8] sm:$0xff]
          %v517 = vld [vmem:[%s442 + $0x10] sm:$0xff]
          %v518 = vld [vmem:[%s442 + $0x18] sm:$0xff]
          %v519 = vld [vmem:[%s442 + $0x20] sm:$0xff]
          %v520 = vld [vmem:[%s442 + $0x28] sm:$0xff]
          %v521 = vld [vmem:[%s442 + $0x30] sm:$0xff]
          %v522 = vld [vmem:[%s442 + $0x38] sm:$0xff]
          %v523 = vpack.c.bf16 %v516, %v515
          %v524 = vpack.c.bf16 %v518, %v517
          %v525 = vpack.c.bf16 %v520, %v519
          %v526 = vpack.c.bf16 %v522, %v521
          %v527 = vld [vmem:[#allocation12] sm:$0xff]
          %v528 = vld [vmem:[#allocation12 + $0x8] sm:$0xf]
          %v529 = vld [vmem:[#allocation12 + $0xc] sm:$0xff]
          %v530 = vld [vmem:[#allocation12 + $0x14] sm:$0xf]
          %v531 = vld [vmem:[#allocation12 + $0x18] sm:$0xff]
          %v532 = vld [vmem:[#allocation12 + $0x20] sm:$0xf]
          %v533 = vld [vmem:[#allocation12 + $0x24] sm:$0xff]
          %v534 = vld [vmem:[#allocation12 + $0x2c] sm:$0xf]
          %v535 = vld [vmem:[#allocation12 + $0x30] sm:$0xff]
          %v536 = vld [vmem:[#allocation12 + $0x38] sm:$0xf]
          %v537 = vld [vmem:[#allocation12 + $0x3c] sm:$0xff]
          %v538 = vld [vmem:[#allocation12 + $0x44] sm:$0xf]
          %v539 = vld [vmem:[#allocation12 + $0x48] sm:$0xff]
          %v540 = vld [vmem:[#allocation12 + $0x50] sm:$0xf]
          %v541 = vld [vmem:[#allocation12 + $0x54] sm:$0xff]
          %v542 = vld [vmem:[#allocation12 + $0x5c] sm:$0xf]
          %v543 = vld [vmem:[#allocation12 + $0x60] sm:$0xff]
          %v544 = vld [vmem:[#allocation12 + $0x68] sm:$0xf]
          %v545 = vld [vmem:[#allocation12 + $0x6c] sm:$0xff]
          %v546 = vld [vmem:[#allocation12 + $0x74] sm:$0xf]
          %v547 = vld [vmem:[#allocation12 + $0x78] sm:$0xff]
          %v548 = vld [vmem:[#allocation12 + $0x80] sm:$0xf]
          %v549 = vld [vmem:[#allocation12 + $0x84] sm:$0xff]
          %v550 = vld [vmem:[#allocation12 + $0x8c] sm:$0xf]
          %v551 = vld [vmem:[#allocation12 + $0x90] sm:$0xff]
          %v552 = vld [vmem:[#allocation12 + $0x98] sm:$0xf]
          %v553 = vld [vmem:[#allocation12 + $0x9c] sm:$0xff]
          %v554 = vld [vmem:[#allocation12 + $0xa4] sm:$0xf]
          %v555 = vld [vmem:[#allocation12 + $0xa8] sm:$0xff]
          %v556 = vld [vmem:[#allocation12 + $0xb0] sm:$0xf]
          %v557 = vld [vmem:[#allocation12 + $0xb4] sm:$0xff]
          %v558 = vld [vmem:[#allocation12 + $0xbc] sm:$0xf]
          %v591 = vunpack.c.l.b16 %v527
          %v592 = vunpack.c.h.b16 %v527
          %v593 = vunpack.c.l.b16 %v528
          %v594 = vunpack.c.l.b16 %v529
          %v595 = vunpack.c.h.b16 %v529
          %v596 = vunpack.c.l.b16 %v530
          %v597 = vunpack.c.l.b16 %v531
          %v598 = vunpack.c.h.b16 %v531
          %v599 = vunpack.c.l.b16 %v532
          %v600 = vunpack.c.l.b16 %v533
          %v601 = vunpack.c.h.b16 %v533
          %v602 = vunpack.c.l.b16 %v534
          %v603 = vunpack.c.l.b16 %v535
          %v604 = vunpack.c.h.b16 %v535
          %v605 = vunpack.c.l.b16 %v536
          %v606 = vunpack.c.l.b16 %v537
          %v607 = vunpack.c.h.b16 %v537
          %v608 = vunpack.c.l.b16 %v538
          %v609 = vunpack.c.l.b16 %v539
          %v610 = vunpack.c.h.b16 %v539
          %v611 = vunpack.c.l.b16 %v540
          %v612 = vunpack.c.l.b16 %v541
          %v613 = vunpack.c.h.b16 %v541
          %v614 = vunpack.c.l.b16 %v542
          %v615 = vunpack.c.l.b16 %v543
          %v616 = vunpack.c.h.b16 %v543
          %v617 = vunpack.c.l.b16 %v544
          %v618 = vunpack.c.l.b16 %v545
          %v619 = vunpack.c.h.b16 %v545
          %v620 = vunpack.c.l.b16 %v546
          %v621 = vunpack.c.l.b16 %v547
          %v622 = vunpack.c.h.b16 %v547
          %v623 = vunpack.c.l.b16 %v548
          %v624 = vunpack.c.l.b16 %v549
          %v625 = vunpack.c.h.b16 %v549
          %v626 = vunpack.c.l.b16 %v550
          %v627 = vunpack.c.l.b16 %v551
          %v628 = vunpack.c.h.b16 %v551
          %v629 = vunpack.c.l.b16 %v552
          %v630 = vunpack.c.l.b16 %v553
          %v631 = vunpack.c.h.b16 %v553
          %v632 = vunpack.c.l.b16 %v554
          %v633 = vunpack.c.l.b16 %v555
          %v634 = vunpack.c.h.b16 %v555
          %v635 = vunpack.c.l.b16 %v556
          %v636 = vunpack.c.l.b16 %v557
          %v637 = vunpack.c.h.b16 %v557
          %v638 = vunpack.c.l.b16 %v558
          %v639 = vpack.c.b16 %v594, %v591
          %v640 = vpack.c.b16 %v595, %v592
          %v641 = vpack.c.b16 %v596, %v593
          %v642 = vpack.c.b16 %v600, %v597
          %v643 = vpack.c.b16 %v601, %v598
          %v644 = vpack.c.b16 %v602, %v599
          %v645 = vpack.c.b16 %v606, %v603
          %v646 = vpack.c.b16 %v607, %v604
          %v647 = vpack.c.b16 %v608, %v605
          %v648 = vpack.c.b16 %v612, %v609
          %v649 = vpack.c.b16 %v613, %v610
          %v650 = vpack.c.b16 %v614, %v611
          %v651 = vpack.c.b16 %v618, %v615
          %v652 = vpack.c.b16 %v619, %v616
          %v653 = vpack.c.b16 %v620, %v617
          %v654 = vpack.c.b16 %v624, %v621
          %v655 = vpack.c.b16 %v625, %v622
          %v656 = vpack.c.b16 %v626, %v623
          %v657 = vpack.c.b16 %v630, %v627
          %v658 = vpack.c.b16 %v631, %v628
          %v659 = vpack.c.b16 %v632, %v629
          %v660 = vpack.c.b16 %v636, %v633
          %v661 = vpack.c.b16 %v637, %v634
          %v662 = vpack.c.b16 %v638, %v635
          %687 = vmatprep.subr.bf16.mxu0 %v661
          %688 = vmatpush1.bf16.msra.mxu0 %v660
          %689 = vmatprep.subr.bf16.mxu0 %v658
          %690 = vmatpush1.bf16.msra.mxu0 %v657
          %691 = vmatprep.subr.bf16.mxu0 %v655
          %692 = vmatpush1.bf16.msra.mxu0 %v654
          %693 = vmatprep.subr.bf16.mxu0 %v652
          %694 = vmatpush1.bf16.msra.mxu0 %v651
          %695 = vmatprep.subr.bf16.mxu0 %v649
          %696 = vmatpush1.bf16.msra.mxu0 %v648
          %697 = vmatprep.subr.bf16.mxu0 %v646
          %698 = vmatpush1.bf16.msra.mxu0 %v645
          %699 = vmatprep.subr.bf16.mxu0 %v643
          %700 = vmatpush1.bf16.msra.mxu0 %v642
          %701 = vmatprep.subr.bf16.mxu0 %v640
          %702 = vmatpush1.bf16.msra.mxu0 %v639
          %703 = vmatprep.subr.bf16.mxu0 0
          %704 = vmatpush2.bf16.msra.mxu0 0
          %705 = vmatprep.subr.bf16.mxu0 0
          %706 = vmatpush2.bf16.msra.mxu0 0
          %707 = vmatprep.subr.bf16.mxu0 0
          %708 = vmatpush2.bf16.msra.mxu0 0
          %709 = vmatprep.subr.bf16.mxu0 0
          %710 = vmatpush2.bf16.msra.mxu0 0
          %711 = vmatprep.subr.bf16.mxu0 0
          %712 = vmatpush2.bf16.msra.mxu0 0
          %713 = vmatprep.subr.bf16.mxu0 0
          %714 = vmatpush2.bf16.msra.mxu0 0
          %715 = vmatprep.subr.bf16.mxu0 0
          %716 = vmatpush2.bf16.msra.mxu0 0
          %717 = vmatprep.subr.bf16.mxu0 0
          %718 = vmatpush2.bf16.msra.mxu0 0
          %719 = vmatprep.mubr.bf16.mxu0 0
          %720 = vmatmul.mubr.bf16.gmra.mxu0 %v523
          %v721 = vpop.f32.mrf.mxu0
          %v722 = vadd.f32 0.0, %v721
          %v723 = vpop.f32.mrf.mxu0
          %v724 = vadd.f32 0.0, %v723
          %v725 = vpop.f32.mrf.mxu0
          %v726 = vadd.f32 0.0, %v725
          %v727 = vpop.f32.mrf.mxu0
          %v728 = vadd.f32 0.0, %v727
          %729 = vmatprep.mubr.bf16.mxu0 0
          %730 = vmatmul.mubr.bf16.gmra.mxu0 %v524
          %v731 = vpop.f32.mrf.mxu0
          %v732 = vadd.f32 0.0, %v731
          %v733 = vpop.f32.mrf.mxu0
          %v734 = vadd.f32 0.0, %v733
          %v735 = vpop.f32.mrf.mxu0
          %v736 = vadd.f32 0.0, %v735
          %v737 = vpop.f32.mrf.mxu0
          %v738 = vadd.f32 0.0, %v737
          %739 = vmatprep.mubr.bf16.mxu0 0
          %740 = vmatmul.mubr.bf16.gmra.mxu0 %v525
          %v741 = vpop.f32.mrf.mxu0
          %v742 = vadd.f32 0.0, %v741
          %v743 = vpop.f32.mrf.mxu0
          %v744 = vadd.f32 0.0, %v743
          %v745 = vpop.f32.mrf.mxu0
          %v746 = vadd.f32 0.0, %v745
          %v747 = vpop.f32.mrf.mxu0
          %v748 = vadd.f32 0.0, %v747
          %749 = vmatprep.mubr.bf16.mxu0 0
          %750 = vmatmul.mubr.bf16.gmra.mxu0 %v526
          %v751 = vpop.f32.mrf.mxu0
          %v752 = vadd.f32 0.0, %v751
          %v753 = vpop.f32.mrf.mxu0
          %v754 = vadd.f32 0.0, %v753
          %v755 = vpop.f32.mrf.mxu0
          %v756 = vadd.f32 0.0, %v755
          %v757 = vpop.f32.mrf.mxu0
          %v758 = vadd.f32 0.0, %v757
          %759 = vdwg.mxu0
          %760 = vmatprep.subr.bf16.mxu0 0
          %761 = vmatpush1.bf16.msra.mxu0 %v662
          %762 = vmatprep.subr.bf16.mxu0 0
          %763 = vmatpush1.bf16.msra.mxu0 %v659
          %764 = vmatprep.subr.bf16.mxu0 0
          %765 = vmatpush1.bf16.msra.mxu0 %v656
          %766 = vmatprep.subr.bf16.mxu0 0
          %767 = vmatpush1.bf16.msra.mxu0 %v653
          %768 = vmatprep.subr.bf16.mxu0 0
          %769 = vmatpush1.bf16.msra.mxu0 %v650
          %770 = vmatprep.subr.bf16.mxu0 0
          %771 = vmatpush1.bf16.msra.mxu0 %v647
          %772 = vmatprep.subr.bf16.mxu0 0
          %773 = vmatpush1.bf16.msra.mxu0 %v644
          %774 = vmatprep.subr.bf16.mxu0 0
          %775 = vmatpush1.bf16.msra.mxu0 %v641
          %776 = vmatprep.subr.bf16.mxu0 0
          %777 = vmatpush2.bf16.msra.mxu0 0
          %778 = vmatprep.subr.bf16.mxu0 0
          %779 = vmatpush2.bf16.msra.mxu0 0
          %780 = vmatprep.subr.bf16.mxu0 0
          %781 = vmatpush2.bf16.msra.mxu0 0
          %782 = vmatprep.subr.bf16.mxu0 0
          %783 = vmatpush2.bf16.msra.mxu0 0
          %784 = vmatprep.subr.bf16.mxu0 0
          %785 = vmatpush2.bf16.msra.mxu0 0
          %786 = vmatprep.subr.bf16.mxu0 0
          %787 = vmatpush2.bf16.msra.mxu0 0
          %788 = vmatprep.subr.bf16.mxu0 0
          %789 = vmatpush2.bf16.msra.mxu0 0
          %790 = vmatprep.subr.bf16.mxu0 0
          %791 = vmatpush2.bf16.msra.mxu0 0
          %792 = vmatprep.mubr.bf16.mxu0 0
          %793 = vmatmul.mubr.bf16.gmra.mxu0 %v523
          %v794 = vpop.f32.mrf.mxu0
          %v795 = vadd.f32 0.0, %v794
          %v796 = vpop.f32.mrf.mxu0
          %v797 = vpop.f32.mrf.mxu0
          %v798 = vadd.f32 0.0, %v797
          %v799 = vpop.f32.mrf.mxu0
          %800 = vmatprep.mubr.bf16.mxu0 0
          %801 = vmatmul.mubr.bf16.gmra.mxu0 %v524
          %v802 = vpop.f32.mrf.mxu0
          %v803 = vadd.f32 0.0, %v802
          %v804 = vpop.f32.mrf.mxu0
          %v805 = vpop.f32.mrf.mxu0
          %v806 = vadd.f32 0.0, %v805
          %v807 = vpop.f32.mrf.mxu0
          %808 = vmatprep.mubr.bf16.mxu0 0
          %809 = vmatmul.mubr.bf16.gmra.mxu0 %v525
          %v810 = vpop.f32.mrf.mxu0
          %v811 = vadd.f32 0.0, %v810
          %v812 = vpop.f32.mrf.mxu0
          %v813 = vpop.f32.mrf.mxu0
          %v814 = vadd.f32 0.0, %v813
          %v815 = vpop.f32.mrf.mxu0
          %816 = vmatprep.mubr.bf16.mxu0 0
          %817 = vmatmul.mubr.bf16.gmra.mxu0 %v526
          %v818 = vpop.f32.mrf.mxu0
          %v819 = vadd.f32 0.0, %v818
          %v820 = vpop.f32.mrf.mxu0
          %v821 = vpop.f32.mrf.mxu0
          %v822 = vadd.f32 0.0, %v821
          %v823 = vpop.f32.mrf.mxu0
          %824 = vdwg.mxu0
          %v825 = vmin.f32 %v724, 80.0
          %v826 = vmin.f32 %v728, 80.0
          %v827 = vmin.f32 %v734, 80.0
          %v828 = vmin.f32 %v738, 80.0
          %v829 = vmin.f32 %v744, 80.0
          %v830 = vmin.f32 %v748, 80.0
          %v831 = vmin.f32 %v754, 80.0
          %v832 = vmin.f32 %v758, 80.0
          %v833 = vxor.u32 %v722, 2147483648
          %v834 = vxor.u32 %v726, 2147483648
          %v835 = vxor.u32 %v732, 2147483648
          %v836 = vxor.u32 %v736, 2147483648
          %v837 = vxor.u32 %v742, 2147483648
          %v838 = vxor.u32 %v746, 2147483648
          %v839 = vxor.u32 %v752, 2147483648
          %v840 = vxor.u32 %v756, 2147483648
          %v841 = vmul.f32 %v833, 1.442695
          %v842 = vpow.pop %v841
          %v843 = vmul.f32 %v834, 1.442695
          %v844 = vpow.pop %v843
          %v845 = vmul.f32 %v835, 1.442695
          %v846 = vpow.pop %v845
          %v847 = vmul.f32 %v836, 1.442695
          %v848 = vpow.pop %v847
          %v849 = vmul.f32 %v837, 1.442695
          %v850 = vpow.pop %v849
          %v851 = vmul.f32 %v838, 1.442695
          %v852 = vpow.pop %v851
          %v853 = vmul.f32 %v839, 1.442695
          %v854 = vpow.pop %v853
          %v855 = vmul.f32 %v840, 1.442695
          %v856 = vpow.pop %v855
          %v857 = vadd.f32 %v842, 1.0
          %v858 = vadd.f32 %v844, 1.0
          %v859 = vadd.f32 %v846, 1.0
          %v860 = vadd.f32 %v848, 1.0
          %v861 = vadd.f32 %v850, 1.0
          %v862 = vadd.f32 %v852, 1.0
          %v863 = vadd.f32 %v854, 1.0
          %v864 = vadd.f32 %v856, 1.0
          %v865 = vrcp.pop %v857
          %v866 = vmul.f32 1.0, %v865
          %v867 = vrcp.pop %v858
          %v868 = vmul.f32 1.0, %v867
          %v869 = vrcp.pop %v859
          %v870 = vmul.f32 1.0, %v869
          %v871 = vrcp.pop %v860
          %v872 = vmul.f32 1.0, %v871
          %v873 = vrcp.pop %v861
          %v874 = vmul.f32 1.0, %v873
          %v875 = vrcp.pop %v862
          %v876 = vmul.f32 1.0, %v875
          %v877 = vrcp.pop %v863
          %v878 = vmul.f32 1.0, %v877
          %v879 = vrcp.pop %v864
          %v880 = vmul.f32 1.0, %v879
          %881 = vst [vmem:[#allocation2] sm:$0xff] %v866
          %882 = vst [vmem:[#allocation2 + $0x8] sm:$0xff] %v868
          %883 = vst [vmem:[#allocation2 + $0x10] sm:$0xff] %v870
          %884 = vst [vmem:[#allocation2 + $0x18] sm:$0xff] %v872
          %885 = vst [vmem:[#allocation2 + $0x20] sm:$0xff] %v874
          %886 = vst [vmem:[#allocation2 + $0x28] sm:$0xff] %v876
          %887 = vst [vmem:[#allocation2 + $0x30] sm:$0xff] %v878
          %888 = vst [vmem:[#allocation2 + $0x38] sm:$0xff] %v880
          %v889 = vmul.f32 %v825, 1.442695
          %v890 = vpow.pop %v889
          %v891 = vmul.f32 %v826, 1.442695
          %v892 = vpow.pop %v891
          %v893 = vmul.f32 %v827, 1.442695
          %v894 = vpow.pop %v893
          %v895 = vmul.f32 %v828, 1.442695
          %v896 = vpow.pop %v895
          %v897 = vmul.f32 %v829, 1.442695
          %v898 = vpow.pop %v897
          %v899 = vmul.f32 %v830, 1.442695
          %v900 = vpow.pop %v899
          %v901 = vmul.f32 %v831, 1.442695
          %v902 = vpow.pop %v901
          %v903 = vmul.f32 %v832, 1.442695
          %v904 = vpow.pop %v903
          %v905 = vmul.f32 %v890, %v795
          %v906 = vmul.f32 %v892, %v798
          %v907 = vmul.f32 %v894, %v803
          %v908 = vmul.f32 %v896, %v806
          %v909 = vmul.f32 %v898, %v811
          %v910 = vmul.f32 %v900, %v814
          %v911 = vmul.f32 %v902, %v819
          %v912 = vmul.f32 %v904, %v822
          %v913 = vpack.c.bf16 %v906, %v905
          %v914 = vpack.c.bf16 %v892, %v890
          %v915 = vpack.c.bf16 %v908, %v907
          %v916 = vpack.c.bf16 %v896, %v894
          %v917 = vpack.c.bf16 %v910, %v909
          %v918 = vpack.c.bf16 %v900, %v898
          %v919 = vpack.c.bf16 %v912, %v911
          %v920 = vpack.c.bf16 %v904, %v902
          %v929 = vunpack.c.l.b16 %v913
          %v930 = vunpack.c.l.b16 %v914
          %v931 = vunpack.c.h.b16 %v913
          %v932 = vunpack.c.h.b16 %v914
          %v933 = vunpack.c.l.b16 %v915
          %v934 = vunpack.c.l.b16 %v916
          %v935 = vunpack.c.h.b16 %v915
          %v936 = vunpack.c.h.b16 %v916
          %v937 = vunpack.c.l.b16 %v917
          %v938 = vunpack.c.l.b16 %v918
          %v939 = vunpack.c.h.b16 %v917
          %v940 = vunpack.c.h.b16 %v918
          %v941 = vunpack.c.l.b16 %v919
          %v942 = vunpack.c.l.b16 %v920
          %v943 = vunpack.c.h.b16 %v919
          %v944 = vunpack.c.h.b16 %v920
          %v945 = vpack.c.b16 %v930, %v929
          %v946 = vpack.c.b16 %v932, %v931
          %v947 = vpack.c.b16 %v934, %v933
          %v948 = vpack.c.b16 %v936, %v935
          %v949 = vpack.c.b16 %v938, %v937
          %v950 = vpack.c.b16 %v940, %v939
          %v951 = vpack.c.b16 %v942, %v941
          %v952 = vpack.c.b16 %v944, %v943
          %961 = vst [vmem:[#allocation3] sm:$0xff] %v945
          %962 = vst [vmem:[#allocation3 + $0x8] sm:$0xff] %v946
          %963 = vst [vmem:[#allocation3 + $0x10] sm:$0xff] %v947
          %964 = vst [vmem:[#allocation3 + $0x18] sm:$0xff] %v948
          %965 = vst [vmem:[#allocation3 + $0x20] sm:$0xff] %v949
          %966 = vst [vmem:[#allocation3 + $0x28] sm:$0xff] %v950
          %967 = vst [vmem:[#allocation3 + $0x30] sm:$0xff] %v951
          %968 = vst [vmem:[#allocation3 + $0x38] sm:$0xff] %v952
          %969 = vst [vmem:[#allocation4] sm:$0xff] 0.0
          %970 = vst [vmem:[#allocation4 + $0x8] sm:$0xff] 0.0
          %971 = vst [vmem:[#allocation4 + $0x10] sm:$0xff] 0.0
          %972 = vst [vmem:[#allocation4 + $0x18] sm:$0xff] 0.0
          %973 = vst [vmem:[#allocation4 + $0x20] sm:$0xff] 0.0
          %974 = vst [vmem:[#allocation4 + $0x28] sm:$0xff] 0.0
          %975 = vst [vmem:[#allocation4 + $0x30] sm:$0xff] 0.0
          %976 = vst [vmem:[#allocation4 + $0x38] sm:$0xff] 0.0
          %977 = vst [vmem:[#allocation4 + $0x40] sm:$0xff] 0.0
          %978 = vst [vmem:[#allocation4 + $0x48] sm:$0xff] 0.0
          %979 = vst [vmem:[#allocation4 + $0x50] sm:$0xff] 0.0
          %980 = vst [vmem:[#allocation4 + $0x58] sm:$0xff] 0.0
          %981 = vst [vmem:[#allocation4 + $0x60] sm:$0xff] 0.0
          %982 = vst [vmem:[#allocation4 + $0x68] sm:$0xff] 0.0
          %983 = vst [vmem:[#allocation4 + $0x70] sm:$0xff] 0.0
          %984 = vst [vmem:[#allocation4 + $0x78] sm:$0xff] 0.0
        $region88: #{tpu_custom_call.1} parent=63 // pred_fallthru
          _
        %s985 = sld [smem:[#allocation6]]
        %p987 = scmp.ne.f32.partialorder %s985, %s985
        %s988 = sshrl.u32 %s985, 16
        %s989 = sand.u32 %s988, 1
        %s990 = sadd.s32 32767, %s989
        %s991 = sadd.s32 %s985, %s990
        %s992 = sand.u32 %s991, 4294901760
        %s993 = scalar_select %p987, 2143289344, %s992
        %s995 = sshrl.u32 %s993, 16
        %v996 = vld [vmem:[%s451] sm:$0xf]
        %v997 = vld [vmem:[%s451 + $0x4] sm:$0xf]
        %v998 = vld [vmem:[%s451 + $0x8] sm:$0xf]
        %v999 = vld [vmem:[%s451 + $0xc] sm:$0xf]
        %v1000 = vld [vmem:[%s451 + $0x10] sm:$0xf]
        %v1001 = vld [vmem:[%s451 + $0x14] sm:$0xf]
        %v1002 = vld [vmem:[%s451 + $0x18] sm:$0xf]
        %v1003 = vld [vmem:[%s451 + $0x1c] sm:$0xf]
        %s1004 = sshll.u32 %s995, 16
        %s1005 = sor.u32 %s995, %s1004
        %v1006 = vstv %s1005
        %v1008 = vmul.bf16 %v1006, %v996
        %v1009 = vmul.bf16 %v1006, %v997
        %v1010 = vmul.bf16 %v1006, %v998
        %v1011 = vmul.bf16 %v1006, %v999
        %v1012 = vmul.bf16 %v1006, %v1000
        %v1013 = vmul.bf16 %v1006, %v1001
        %v1014 = vmul.bf16 %v1006, %v1002
        %v1015 = vmul.bf16 %v1006, %v1003
        %v1017 = vmul.bf16 %v1008, 1069105081
        %v1018 = vpow.bf16.pop %v1017
        %v1020 = vmul.bf16 %v1009, 1069105081
        %v1021 = vpow.bf16.pop %v1020
        %v1023 = vmul.bf16 %v1010, 1069105081
        %v1024 = vpow.bf16.pop %v1023
        %v1026 = vmul.bf16 %v1011, 1069105081
        %v1027 = vpow.bf16.pop %v1026
        %v1029 = vmul.bf16 %v1012, 1069105081
        %v1030 = vpow.bf16.pop %v1029
        %v1032 = vmul.bf16 %v1013, 1069105081
        %v1033 = vpow.bf16.pop %v1032
        %v1035 = vmul.bf16 %v1014, 1069105081
        %v1036 = vpow.bf16.pop %v1035
        %v1038 = vmul.bf16 %v1015, 1069105081
        %v1039 = vpow.bf16.pop %v1038
        %s1040 = smul.u32 %s39, 16
        %s1041 = sshra.s32 %s1040, 3
        %s1042 = sand.u32 %s1040, 7
        %s1043 = smul.u32 %s1041, 2
        %s1044 = smul.addr %s1043, 4
        %s1045 = scalar_lea.vmem [#allocation3], %s1044
        %v1046 = vld [vmem:[%s1045] sm:$0xff]
        %v1047 = vld [vmem:[%s1045 + $0x8] sm:$0xff]
        %v1048 = vld [vmem:[%s1045 + $0x10] sm:$0xff]
        %v1049 = vld [vmem:[%s1045 + $0x18] sm:$0xff]
        %v1050 = vld [vmem:[%s1045 + $0x20] sm:$0xff]
        %v1051 = vld [vmem:[%s1045 + $0x28] sm:$0xff]
        %v1052 = vld [vmem:[%s1045 + $0x30] sm:$0xff]
        %v1053 = vld [vmem:[%s1045 + $0x38] sm:$0xff]
        %v1054 = vld [vmem:[#allocation4] sm:$0xff]
        %v1055 = vld [vmem:[#allocation4 + $0x8] sm:$0xff]
        %v1056 = vld [vmem:[#allocation4 + $0x10] sm:$0xff]
        %v1057 = vld [vmem:[#allocation4 + $0x18] sm:$0xff]
        %v1058 = vld [vmem:[#allocation4 + $0x20] sm:$0xff]
        %v1059 = vld [vmem:[#allocation4 + $0x28] sm:$0xff]
        %v1060 = vld [vmem:[#allocation4 + $0x30] sm:$0xff]
        %v1061 = vld [vmem:[#allocation4 + $0x38] sm:$0xff]
        %v1062 = vld [vmem:[#allocation4 + $0x40] sm:$0xff]
        %v1063 = vld [vmem:[#allocation4 + $0x48] sm:$0xff]
        %v1064 = vld [vmem:[#allocation4 + $0x50] sm:$0xff]
        %v1065 = vld [vmem:[#allocation4 + $0x58] sm:$0xff]
        %v1066 = vld [vmem:[#allocation4 + $0x60] sm:$0xff]
        %v1067 = vld [vmem:[#allocation4 + $0x68] sm:$0xff]
        %v1068 = vld [vmem:[#allocation4 + $0x70] sm:$0xff]
        %v1069 = vld [vmem:[#allocation4 + $0x78] sm:$0xff]
        %v1072 = vunpack.c.l.b16 %v1018
        %v1073 = vunpack.c.l.b16 %v1021
        %v1074 = vpack.c.b16 %v1073, %v1072
        %v1077 = vunpack.c.l.b16 %v1046
        %v1078 = vunpack.c.h.b16 %v1046
        %v1079 = vunpack.c.l.b16 %v1047
        %v1080 = vunpack.c.h.b16 %v1047
        %v1081 = vpack.c.b16 %v1079, %v1077
        %v1082 = vpack.c.b16 %v1080, %v1078
        %vm1085 = vcmask 130048
        %v1087 = vsel %vm1085, %v1074, 0
        %1089 = vmatprep.subr.bf16.mxu0 0
        %1090 = vmatpush1.bf16.msra.mxu0 0
        %1091 = vmatprep.subr.bf16.mxu0 0
        %1092 = vmatpush1.bf16.msra.mxu0 0
        %1093 = vmatprep.subr.bf16.mxu0 0
        %1094 = vmatpush1.bf16.msra.mxu0 0
        %1095 = vmatprep.subr.bf16.mxu0 0
        %1096 = vmatpush1.bf16.msra.mxu0 0
        %1097 = vmatprep.subr.bf16.mxu0 0
        %1098 = vmatpush1.bf16.msra.mxu0 0
        %1099 = vmatprep.subr.bf16.mxu0 0
        %1100 = vmatpush1.bf16.msra.mxu0 0
        %1101 = vmatprep.subr.bf16.mxu0 0
        %1102 = vmatpush1.bf16.msra.mxu0 0
        %1103 = vmatprep.subr.bf16.mxu0 %v1082
        %1104 = vmatpush1.bf16.msra.mxu0 %v1081
        %1105 = vmatprep.subr.bf16.mxu0 0
        %1106 = vmatpush2.bf16.msra.mxu0 0
        %1107 = vmatprep.subr.bf16.mxu0 0
        %1108 = vmatpush2.bf16.msra.mxu0 0
        %1109 = vmatprep.subr.bf16.mxu0 0
        %1110 = vmatpush2.bf16.msra.mxu0 0
        %1111 = vmatprep.subr.bf16.mxu0 0
        %1112 = vmatpush2.bf16.msra.mxu0 0
        %1113 = vmatprep.subr.bf16.mxu0 0
        %1114 = vmatpush2.bf16.msra.mxu0 0
        %1115 = vmatprep.subr.bf16.mxu0 0
        %1116 = vmatpush2.bf16.msra.mxu0 0
        %1117 = vmatprep.subr.bf16.mxu0 0
        %1118 = vmatpush2.bf16.msra.mxu0 0
        %1119 = vmatprep.subr.bf16.mxu0 0
        %1120 = vmatpush2.bf16.msra.mxu0 0
        %1121 = vmatprep.mubr.bf16.mxu0 0
        %1122 = vmatmul.mubr.bf16.gmra.mxu0 %v1087
        %v1123 = vpop.f32.mrf.mxu0
        %v1124 = vadd.f32 0.0, %v1123
        %v1125 = vpop.f32.mrf.mxu0
        %v1126 = vadd.f32 0.0, %v1125
        %v1127 = vpop.f32.mrf.mxu0
        %v1128 = vadd.f32 0.0, %v1127
        %v1129 = vpop.f32.mrf.mxu0
        %v1130 = vadd.f32 0.0, %v1129
        %1131 = vdwg.mxu0
        %v1134 = vunpack.c.l.b16 %v1024
        %v1135 = vunpack.c.l.b16 %v1027
        %v1136 = vpack.c.b16 %v1135, %v1134
        %v1139 = vunpack.c.l.b16 %v1048
        %v1140 = vunpack.c.h.b16 %v1048
        %v1141 = vunpack.c.l.b16 %v1049
        %v1142 = vunpack.c.h.b16 %v1049
        %v1143 = vpack.c.b16 %v1141, %v1139
        %v1144 = vpack.c.b16 %v1142, %v1140
        %v1148 = vsel %vm1085, %v1136, 0
        %1150 = vmatprep.subr.bf16.mxu0 0
        %1151 = vmatpush1.bf16.msra.mxu0 0
        %1152 = vmatprep.subr.bf16.mxu0 0
        %1153 = vmatpush1.bf16.msra.mxu0 0
        %1154 = vmatprep.subr.bf16.mxu0 0
        %1155 = vmatpush1.bf16.msra.mxu0 0
        %1156 = vmatprep.subr.bf16.mxu0 0
        %1157 = vmatpush1.bf16.msra.mxu0 0
        %1158 = vmatprep.subr.bf16.mxu0 0
        %1159 = vmatpush1.bf16.msra.mxu0 0
        %1160 = vmatprep.subr.bf16.mxu0 0
        %1161 = vmatpush1.bf16.msra.mxu0 0
        %1162 = vmatprep.subr.bf16.mxu0 0
        %1163 = vmatpush1.bf16.msra.mxu0 0
        %1164 = vmatprep.subr.bf16.mxu0 %v1144
        %1165 = vmatpush1.bf16.msra.mxu0 %v1143
        %1166 = vmatprep.subr.bf16.mxu0 0
        %1167 = vmatpush2.bf16.msra.mxu0 0
        %1168 = vmatprep.subr.bf16.mxu0 0
        %1169 = vmatpush2.bf16.msra.mxu0 0
        %1170 = vmatprep.subr.bf16.mxu0 0
        %1171 = vmatpush2.bf16.msra.mxu0 0
        %1172 = vmatprep.subr.bf16.mxu0 0
        %1173 = vmatpush2.bf16.msra.mxu0 0
        %1174 = vmatprep.subr.bf16.mxu0 0
        %1175 = vmatpush2.bf16.msra.mxu0 0
        %1176 = vmatprep.subr.bf16.mxu0 0
        %1177 = vmatpush2.bf16.msra.mxu0 0
        %1178 = vmatprep.subr.bf16.mxu0 0
        %1179 = vmatpush2.bf16.msra.mxu0 0
        %1180 = vmatprep.subr.bf16.mxu0 0
        %1181 = vmatpush2.bf16.msra.mxu0 0
        %1182 = vmatprep.mubr.bf16.mxu0 0
        %1183 = vmatmul.mubr.bf16.gmra.mxu0 %v1148
        %v1184 = vpop.f32.mrf.mxu0
        %v1185 = vadd.f32 0.0, %v1184
        %v1186 = vpop.f32.mrf.mxu0
        %v1187 = vadd.f32 0.0, %v1186
        %v1188 = vpop.f32.mrf.mxu0
        %v1189 = vadd.f32 0.0, %v1188
        %v1190 = vpop.f32.mrf.mxu0
        %v1191 = vadd.f32 0.0, %v1190
        %1192 = vdwg.mxu0
        %v1195 = vunpack.c.l.b16 %v1030
        %v1196 = vunpack.c.l.b16 %v1033
        %v1197 = vpack.c.b16 %v1196, %v1195
        %v1200 = vunpack.c.l.b16 %v1050
        %v1201 = vunpack.c.h.b16 %v1050
        %v1202 = vunpack.c.l.b16 %v1051
        %v1203 = vunpack.c.h.b16 %v1051
        %v1204 = vpack.c.b16 %v1202, %v1200
        %v1205 = vpack.c.b16 %v1203, %v1201
        %v1209 = vsel %vm1085, %v1197, 0
        %1211 = vmatprep.subr.bf16.mxu0 0
        %1212 = vmatpush1.bf16.msra.mxu0 0
        %1213 = vmatprep.subr.bf16.mxu0 0
        %1214 = vmatpush1.bf16.msra.mxu0 0
        %1215 = vmatprep.subr.bf16.mxu0 0
        %1216 = vmatpush1.bf16.msra.mxu0 0
        %1217 = vmatprep.subr.bf16.mxu0 0
        %1218 = vmatpush1.bf16.msra.mxu0 0
        %1219 = vmatprep.subr.bf16.mxu0 0
        %1220 = vmatpush1.bf16.msra.mxu0 0
        %1221 = vmatprep.subr.bf16.mxu0 0
        %1222 = vmatpush1.bf16.msra.mxu0 0
        %1223 = vmatprep.subr.bf16.mxu0 0
        %1224 = vmatpush1.bf16.msra.mxu0 0
        %1225 = vmatprep.subr.bf16.mxu0 %v1205
        %1226 = vmatpush1.bf16.msra.mxu0 %v1204
        %1227 = vmatprep.subr.bf16.mxu0 0
        %1228 = vmatpush2.bf16.msra.mxu0 0
        %1229 = vmatprep.subr.bf16.mxu0 0
        %1230 = vmatpush2.bf16.msra.mxu0 0
        %1231 = vmatprep.subr.bf16.mxu0 0
        %1232 = vmatpush2.bf16.msra.mxu0 0
        %1233 = vmatprep.subr.bf16.mxu0 0
        %1234 = vmatpush2.bf16.msra.mxu0 0
        %1235 = vmatprep.subr.bf16.mxu0 0
        %1236 = vmatpush2.bf16.msra.mxu0 0
        %1237 = vmatprep.subr.bf16.mxu0 0
        %1238 = vmatpush2.bf16.msra.mxu0 0
        %1239 = vmatprep.subr.bf16.mxu0 0
        %1240 = vmatpush2.bf16.msra.mxu0 0
        %1241 = vmatprep.subr.bf16.mxu0 0
        %1242 = vmatpush2.bf16.msra.mxu0 0
        %1243 = vmatprep.mubr.bf16.mxu0 0
        %1244 = vmatmul.mubr.bf16.gmra.mxu0 %v1209
        %v1245 = vpop.f32.mrf.mxu0
        %v1246 = vadd.f32 0.0, %v1245
        %v1247 = vpop.f32.mrf.mxu0
        %v1248 = vadd.f32 0.0, %v1247
        %v1249 = vpop.f32.mrf.mxu0
        %v1250 = vadd.f32 0.0, %v1249
        %v1251 = vpop.f32.mrf.mxu0
        %v1252 = vadd.f32 0.0, %v1251
        %1253 = vdwg.mxu0
        %v1256 = vunpack.c.l.b16 %v1036
        %v1257 = vunpack.c.l.b16 %v1039
        %v1258 = vpack.c.b16 %v1257, %v1256
        %v1261 = vunpack.c.l.b16 %v1052
        %v1262 = vunpack.c.h.b16 %v1052
        %v1263 = vunpack.c.l.b16 %v1053
        %v1264 = vunpack.c.h.b16 %v1053
        %v1265 = vpack.c.b16 %v1263, %v1261
        %v1266 = vpack.c.b16 %v1264, %v1262
        %v1270 = vsel %vm1085, %v1258, 0
        %1272 = vmatprep.subr.bf16.mxu0 0
        %1273 = vmatpush1.bf16.msra.mxu0 0
        %1274 = vmatprep.subr.bf16.mxu0 0
        %1275 = vmatpush1.bf16.msra.mxu0 0
        %1276 = vmatprep.subr.bf16.mxu0 0
        %1277 = vmatpush1.bf16.msra.mxu0 0
        %1278 = vmatprep.subr.bf16.mxu0 0
        %1279 = vmatpush1.bf16.msra.mxu0 0
        %1280 = vmatprep.subr.bf16.mxu0 0
        %1281 = vmatpush1.bf16.msra.mxu0 0
        %1282 = vmatprep.subr.bf16.mxu0 0
        %1283 = vmatpush1.bf16.msra.mxu0 0
        %1284 = vmatprep.subr.bf16.mxu0 0
        %1285 = vmatpush1.bf16.msra.mxu0 0
        %1286 = vmatprep.subr.bf16.mxu0 %v1266
        %1287 = vmatpush1.bf16.msra.mxu0 %v1265
        %1288 = vmatprep.subr.bf16.mxu0 0
        %1289 = vmatpush2.bf16.msra.mxu0 0
        %1290 = vmatprep.subr.bf16.mxu0 0
        %1291 = vmatpush2.bf16.msra.mxu0 0
        %1292 = vmatprep.subr.bf16.mxu0 0
        %1293 = vmatpush2.bf16.msra.mxu0 0
        %1294 = vmatprep.subr.bf16.mxu0 0
        %1295 = vmatpush2.bf16.msra.mxu0 0
        %1296 = vmatprep.subr.bf16.mxu0 0
        %1297 = vmatpush2.bf16.msra.mxu0 0
        %1298 = vmatprep.subr.bf16.mxu0 0
        %1299 = vmatpush2.bf16.msra.mxu0 0
        %1300 = vmatprep.subr.bf16.mxu0 0
        %1301 = vmatpush2.bf16.msra.mxu0 0
        %1302 = vmatprep.subr.bf16.mxu0 0
        %1303 = vmatpush2.bf16.msra.mxu0 0
        %1304 = vmatprep.mubr.bf16.mxu0 0
        %1305 = vmatmul.mubr.bf16.gmra.mxu0 %v1270
        %v1306 = vpop.f32.mrf.mxu0
        %v1307 = vadd.f32 0.0, %v1306
        %v1308 = vpop.f32.mrf.mxu0
        %v1309 = vadd.f32 0.0, %v1308
        %v1310 = vpop.f32.mrf.mxu0
        %v1311 = vadd.f32 0.0, %v1310
        %v1312 = vpop.f32.mrf.mxu0
        %v1313 = vadd.f32 0.0, %v1312
        %1314 = vdwg.mxu0
        %v1315 = vadd.f32 %v1054, %v1124
        %v1316 = vadd.f32 %v1055, %v1126
        %v1317 = vadd.f32 %v1056, %v1128
        %v1318 = vadd.f32 %v1057, %v1130
        %v1319 = vadd.f32 %v1058, %v1185
        %v1320 = vadd.f32 %v1059, %v1187
        %v1321 = vadd.f32 %v1060, %v1189
        %v1322 = vadd.f32 %v1061, %v1191
        %v1323 = vadd.f32 %v1062, %v1246
        %v1324 = vadd.f32 %v1063, %v1248
        %v1325 = vadd.f32 %v1064, %v1250
        %v1326 = vadd.f32 %v1065, %v1252
        %v1327 = vadd.f32 %v1066, %v1307
        %v1328 = vadd.f32 %v1067, %v1309
        %v1329 = vadd.f32 %v1068, %v1311
        %v1330 = vadd.f32 %v1069, %v1313
        %1331 = vst [vmem:[#allocation4] sm:$0xff] %v1315
        %1332 = vst [vmem:[#allocation4 + $0x8] sm:$0xff] %v1316
        %1333 = vst [vmem:[#allocation4 + $0x10] sm:$0xff] %v1317
        %1334 = vst [vmem:[#allocation4 + $0x18] sm:$0xff] %v1318
        %1335 = vst [vmem:[#allocation4 + $0x20] sm:$0xff] %v1319
        %1336 = vst [vmem:[#allocation4 + $0x28] sm:$0xff] %v1320
        %1337 = vst [vmem:[#allocation4 + $0x30] sm:$0xff] %v1321
        %1338 = vst [vmem:[#allocation4 + $0x38] sm:$0xff] %v1322
        %1339 = vst [vmem:[#allocation4 + $0x40] sm:$0xff] %v1323
        %1340 = vst [vmem:[#allocation4 + $0x48] sm:$0xff] %v1324
        %1341 = vst [vmem:[#allocation4 + $0x50] sm:$0xff] %v1325
        %1342 = vst [vmem:[#allocation4 + $0x58] sm:$0xff] %v1326
        %1343 = vst [vmem:[#allocation4 + $0x60] sm:$0xff] %v1327
        %1344 = vst [vmem:[#allocation4 + $0x68] sm:$0xff] %v1328
        %1345 = vst [vmem:[#allocation4 + $0x70] sm:$0xff] %v1329
        %1346 = vst [vmem:[#allocation4 + $0x78] sm:$0xff] %v1330
        // Predicated region
        $region89: #{tpu_custom_call.1} parent=63 // pred_check
          %p1347 = pneg %p511
        $region90: #{tpu_custom_call.1} parent=63 // pred_check_branch
          %1349 = sbr.rel (%p1347) target = $region92
        $region91: #{tpu_custom_call.1} parent=63 // pred_region
          %v1350 = vld [vmem:[#allocation4] sm:$0xff]
          %v1351 = vld [vmem:[#allocation4 + $0x8] sm:$0xff]
          %v1352 = vld [vmem:[#allocation4 + $0x10] sm:$0xff]
          %v1353 = vld [vmem:[#allocation4 + $0x18] sm:$0xff]
          %v1354 = vld [vmem:[#allocation4 + $0x20] sm:$0xff]
          %v1355 = vld [vmem:[#allocation4 + $0x28] sm:$0xff]
          %v1356 = vld [vmem:[#allocation4 + $0x30] sm:$0xff]
          %v1357 = vld [vmem:[#allocation4 + $0x38] sm:$0xff]
          %v1358 = vld [vmem:[#allocation4 + $0x40] sm:$0xff]
          %v1359 = vld [vmem:[#allocation4 + $0x48] sm:$0xff]
          %v1360 = vld [vmem:[#allocation4 + $0x50] sm:$0xff]
          %v1361 = vld [vmem:[#allocation4 + $0x58] sm:$0xff]
          %v1362 = vld [vmem:[#allocation4 + $0x60] sm:$0xff]
          %v1363 = vld [vmem:[#allocation4 + $0x68] sm:$0xff]
          %v1364 = vld [vmem:[#allocation4 + $0x70] sm:$0xff]
          %v1365 = vld [vmem:[#allocation4 + $0x78] sm:$0xff]
          %v1366 = vld [vmem:[#allocation2] sm:$0xff]
          %v1367 = vld [vmem:[#allocation2 + $0x8] sm:$0xff]
          %v1368 = vld [vmem:[#allocation2 + $0x10] sm:$0xff]
          %v1369 = vld [vmem:[#allocation2 + $0x18] sm:$0xff]
          %v1370 = vld [vmem:[#allocation2 + $0x20] sm:$0xff]
          %v1371 = vld [vmem:[#allocation2 + $0x28] sm:$0xff]
          %v1372 = vld [vmem:[#allocation2 + $0x30] sm:$0xff]
          %v1373 = vld [vmem:[#allocation2 + $0x38] sm:$0xff]
          %v1374 = vrcp.pop %v1351
          %v1375 = vrcp.pop %v1353
          %v1376 = vrcp.pop %v1355
          %v1377 = vrcp.pop %v1357
          %v1378 = vrcp.pop %v1359
          %v1379 = vrcp.pop %v1361
          %v1380 = vrcp.pop %v1363
          %v1381 = vrcp.pop %v1365
          %v1382 = vmul.f32 %v1350, %v1374
          %v1383 = vmul.f32 %v1352, %v1375
          %v1384 = vmul.f32 %v1354, %v1376
          %v1385 = vmul.f32 %v1356, %v1377
          %v1386 = vmul.f32 %v1358, %v1378
          %v1387 = vmul.f32 %v1360, %v1379
          %v1388 = vmul.f32 %v1362, %v1380
          %v1389 = vmul.f32 %v1364, %v1381
          %v1390 = vmul.f32 %v1366, %v1382
          %v1391 = vmul.f32 %v1367, %v1383
          %v1392 = vmul.f32 %v1368, %v1384
          %v1393 = vmul.f32 %v1369, %v1385
          %v1394 = vmul.f32 %v1370, %v1386
          %v1395 = vmul.f32 %v1371, %v1387
          %v1396 = vmul.f32 %v1372, %v1388
          %v1397 = vmul.f32 %v1373, %v1389
          %v1398 = vld [vmem:[%s442] sm:$0xff]
          %v1399 = vld [vmem:[%s442 + $0x8] sm:$0xff]
          %v1400 = vld [vmem:[%s442 + $0x10] sm:$0xff]
          %v1401 = vld [vmem:[%s442 + $0x18] sm:$0xff]
          %v1402 = vld [vmem:[%s442 + $0x20] sm:$0xff]
          %v1403 = vld [vmem:[%s442 + $0x28] sm:$0xff]
          %v1404 = vld [vmem:[%s442 + $0x30] sm:$0xff]
          %v1405 = vld [vmem:[%s442 + $0x38] sm:$0xff]
          %v1406 = vadd.f32 %v1398, %v1390
          %v1407 = vadd.f32 %v1399, %v1391
          %v1408 = vadd.f32 %v1400, %v1392
          %v1409 = vadd.f32 %v1401, %v1393
          %v1410 = vadd.f32 %v1402, %v1394
          %v1411 = vadd.f32 %v1403, %v1395
          %v1412 = vadd.f32 %v1404, %v1396
          %v1413 = vadd.f32 %v1405, %v1397
          %v1414 = vadd.f32 %v1406, %v1407
          %v1415 = vrot.slane %v1414, 4
          %v1416 = vadd.f32 %v1414, %v1415
          %v1417 = vrot.slane %v1416, 2
          %v1418 = vadd.f32 %v1416, %v1417
          %v1419 = vrot.slane %v1418, 1
          %v1420 = vadd.f32 %v1418, %v1419
          %v1421 = vadd.f32 %v1408, %v1409
          %v1422 = vrot.slane %v1421, 4
          %v1423 = vadd.f32 %v1421, %v1422
          %v1424 = vrot.slane %v1423, 2
          %v1425 = vadd.f32 %v1423, %v1424
          %v1426 = vrot.slane %v1425, 1
          %v1427 = vadd.f32 %v1425, %v1426
          %v1428 = vadd.f32 %v1410, %v1411
          %v1429 = vrot.slane %v1428, 4
          %v1430 = vadd.f32 %v1428, %v1429
          %v1431 = vrot.slane %v1430, 2
          %v1432 = vadd.f32 %v1430, %v1431
          %v1433 = vrot.slane %v1432, 1
          %v1434 = vadd.f32 %v1432, %v1433
          %v1435 = vadd.f32 %v1412, %v1413
          %v1436 = vrot.slane %v1435, 4
          %v1437 = vadd.f32 %v1435, %v1436
          %v1438 = vrot.slane %v1437, 2
          %v1439 = vadd.f32 %v1437, %v1438
          %v1440 = vrot.slane %v1439, 1
          %v1441 = vadd.f32 %v1439, %v1440
          %v1442 = vrcp.pop 16.0
          %v1443 = vmul.f32 %v1420, %v1442
          %v1444 = vmul.f32 %v1427, %v1442
          %v1445 = vmul.f32 %v1434, %v1442
          %v1446 = vmul.f32 %v1441, %v1442
          %v1447 = vmul.f32 %v1406, %v1406
          %v1448 = vmul.f32 %v1407, %v1407
          %v1449 = vmul.f32 %v1408, %v1408
          %v1450 = vmul.f32 %v1409, %v1409
          %v1451 = vmul.f32 %v1410, %v1410
          %v1452 = vmul.f32 %v1411, %v1411
          %v1453 = vmul.f32 %v1412, %v1412
          %v1454 = vmul.f32 %v1413, %v1413
          %v1455 = vadd.f32 %v1447, %v1448
          %v1456 = vrot.slane %v1455, 4
          %v1457 = vadd.f32 %v1455, %v1456
          %v1458 = vrot.slane %v1457, 2
          %v1459 = vadd.f32 %v1457, %v1458
          %v1460 = vrot.slane %v1459, 1
          %v1461 = vadd.f32 %v1459, %v1460
          %v1462 = vadd.f32 %v1449, %v1450
          %v1463 = vrot.slane %v1462, 4
          %v1464 = vadd.f32 %v1462, %v1463
          %v1465 = vrot.slane %v1464, 2
          %v1466 = vadd.f32 %v1464, %v1465
          %v1467 = vrot.slane %v1466, 1
          %v1468 = vadd.f32 %v1466, %v1467
          %v1469 = vadd.f32 %v1451, %v1452
          %v1470 = vrot.slane %v1469, 4
          %v1471 = vadd.f32 %v1469, %v1470
          %v1472 = vrot.slane %v1471, 2
          %v1473 = vadd.f32 %v1471, %v1472
          %v1474 = vrot.slane %v1473, 1
          %v1475 = vadd.f32 %v1473, %v1474
          %v1476 = vadd.f32 %v1453, %v1454
          %v1477 = vrot.slane %v1476, 4
          %v1478 = vadd.f32 %v1476, %v1477
          %v1479 = vrot.slane %v1478, 2
          %v1480 = vadd.f32 %v1478, %v1479
          %v1481 = vrot.slane %v1480, 1
          %v1482 = vadd.f32 %v1480, %v1481
          %v1483 = vmul.f32 %v1461, %v1442
          %v1484 = vmul.f32 %v1468, %v1442
          %v1485 = vmul.f32 %v1475, %v1442
          %v1486 = vmul.f32 %v1482, %v1442
          %v1487 = vmul.f32 %v1443, %v1443
          %v1488 = vmul.f32 %v1444, %v1444
          %v1489 = vmul.f32 %v1445, %v1445
          %v1490 = vmul.f32 %v1446, %v1446
          %v1491 = vsub.f32 %v1483, %v1487
          %v1492 = vsub.f32 %v1484, %v1488
          %v1493 = vsub.f32 %v1485, %v1489
          %v1494 = vsub.f32 %v1486, %v1490
          %v1495 = vsub.f32 %v1406, %v1443
          %v1496 = vsub.f32 %v1407, %v1443
          %v1497 = vsub.f32 %v1408, %v1444
          %v1498 = vsub.f32 %v1409, %v1444
          %v1499 = vsub.f32 %v1410, %v1445
          %v1500 = vsub.f32 %v1411, %v1445
          %v1501 = vsub.f32 %v1412, %v1446
          %v1502 = vsub.f32 %v1413, %v1446
          %v1503 = vadd.f32 %v1491, 1e-05
          %v1504 = vadd.f32 %v1492, 1e-05
          %v1505 = vadd.f32 %v1493, 1e-05
          %v1506 = vadd.f32 %v1494, 1e-05
          %v1507 = vrsqrt.pop %v1503
          %v1508 = vrsqrt.pop %v1504
          %v1509 = vrsqrt.pop %v1505
          %v1510 = vrsqrt.pop %v1506
          %v1511 = vmul.f32 %v1495, %v1507
          %v1512 = vmul.f32 %v1496, %v1507
          %v1513 = vmul.f32 %v1497, %v1508
          %v1514 = vmul.f32 %v1498, %v1508
          %v1515 = vmul.f32 %v1499, %v1509
          %v1516 = vmul.f32 %v1500, %v1509
          %v1517 = vmul.f32 %v1501, %v1510
          %v1518 = vmul.f32 %v1502, %v1510
          %v1519 = vld [vmem:[%s4] sm:$0x1]
          %v1521 = vlaneseq
          %v1522 = vshrl.u32 %v1521, 7
          %v1523 = vsub.s32 0, %v1522
          %v1524 = vrot.slane %v1519, %v1523
          %v1526 = vmul.f32 %v1511, %v1524
          %v1527 = vmul.f32 %v1512, %v1524
          %v1528 = vmul.f32 %v1513, %v1524
          %v1529 = vmul.f32 %v1514, %v1524
          %v1530 = vmul.f32 %v1515, %v1524
          %v1531 = vmul.f32 %v1516, %v1524
          %v1532 = vmul.f32 %v1517, %v1524
          %v1533 = vmul.f32 %v1518, %v1524
          %v1534 = vld [vmem:[%s5] sm:$0x1]
          %v1536 = vlaneseq
          %v1537 = vshrl.u32 %v1536, 7
          %v1538 = vsub.s32 0, %v1537
          %v1539 = vrot.slane %v1534, %v1538
          %v1541 = vadd.f32 %v1526, %v1539
          %v1542 = vadd.f32 %v1527, %v1539
          %v1543 = vadd.f32 %v1528, %v1539
          %v1544 = vadd.f32 %v1529, %v1539
          %v1545 = vadd.f32 %v1530, %v1539
          %v1546 = vadd.f32 %v1531, %v1539
          %v1547 = vadd.f32 %v1532, %v1539
          %v1548 = vadd.f32 %v1533, %v1539
          %v1549 = vpack.c.bf16 %v1542, %v1541
          %v1550 = vpack.c.bf16 %v1544, %v1543
          %v1551 = vpack.c.bf16 %v1546, %v1545
          %v1552 = vpack.c.bf16 %v1548, %v1547
          %v1553 = vld [vmem:[#allocation13] sm:$0xff]
          %v1554 = vld [vmem:[#allocation13 + $0x8] sm:$0xff]
          %v1555 = vld [vmem:[#allocation13 + $0x10] sm:$0xff]
          %v1556 = vld [vmem:[#allocation13 + $0x18] sm:$0xff]
          %v1557 = vld [vmem:[#allocation13 + $0x20] sm:$0xff]
          %v1558 = vld [vmem:[#allocation13 + $0x28] sm:$0xff]
          %v1559 = vld [vmem:[#allocation13 + $0x30] sm:$0xff]
          %v1560 = vld [vmem:[#allocation13 + $0x38] sm:$0xff]
          %v1561 = vld [vmem:[#allocation13 + $0x40] sm:$0xff]
          %v1562 = vld [vmem:[#allocation13 + $0x48] sm:$0xff]
          %v1563 = vld [vmem:[#allocation13 + $0x50] sm:$0xff]
          %v1564 = vld [vmem:[#allocation13 + $0x58] sm:$0xff]
          %v1565 = vld [vmem:[#allocation13 + $0x60] sm:$0xff]
          %v1566 = vld [vmem:[#allocation13 + $0x68] sm:$0xff]
          %v1567 = vld [vmem:[#allocation13 + $0x70] sm:$0xff]
          %v1568 = vld [vmem:[#allocation13 + $0x78] sm:$0xff]
          %v1569 = vld [vmem:[#allocation13 + $0x80] sm:$0xff]
          %v1570 = vld [vmem:[#allocation13 + $0x88] sm:$0xff]
          %v1571 = vld [vmem:[#allocation13 + $0x90] sm:$0xff]
          %v1572 = vld [vmem:[#allocation13 + $0x98] sm:$0xff]
          %v1573 = vld [vmem:[#allocation13 + $0xa0] sm:$0xff]
          %v1574 = vld [vmem:[#allocation13 + $0xa8] sm:$0xff]
          %v1575 = vld [vmem:[#allocation13 + $0xb0] sm:$0xff]
          %v1576 = vld [vmem:[#allocation13 + $0xb8] sm:$0xff]
          %v1577 = vld [vmem:[#allocation13 + $0xc0] sm:$0xff]
          %v1578 = vld [vmem:[#allocation13 + $0xc8] sm:$0xff]
          %v1579 = vld [vmem:[#allocation13 + $0xd0] sm:$0xff]
          %v1580 = vld [vmem:[#allocation13 + $0xd8] sm:$0xff]
          %v1581 = vld [vmem:[#allocation13 + $0xe0] sm:$0xff]
          %v1582 = vld [vmem:[#allocation13 + $0xe8] sm:$0xff]
          %v1583 = vld [vmem:[#allocation13 + $0xf0] sm:$0xff]
          %v1584 = vld [vmem:[#allocation13 + $0xf8] sm:$0xff]
          %v1585 = vld [vmem:[%s7] sm:$0xf]
          %v1587 = vlaneseq
          %v1588 = vshrl.u32 %v1587, 7
          %v1589 = vsub.s32 0, %v1588
          %v1590 = vrot.slane %v1585, %v1589
          %v1591 = vlaneseq
          %v1592 = vshrl.u32 %v1591, 7
          %v1593 = vsub.s32 1, %v1592
          %v1594 = vrot.slane %v1585, %v1593
          %v1595 = vlaneseq
          %v1596 = vshrl.u32 %v1595, 7
          %v1597 = vsub.s32 2, %v1596
          %v1598 = vrot.slane %v1585, %v1597
          %v1599 = vlaneseq
          %v1600 = vshrl.u32 %v1599, 7
          %v1601 = vsub.s32 3, %v1600
          %v1602 = vrot.slane %v1585, %v1601
          %v1639 = vunpack.c.l.b16 %v1553
          %v1640 = vunpack.c.h.b16 %v1553
          %v1641 = vunpack.c.l.b16 %v1554
          %v1642 = vunpack.c.h.b16 %v1554
          %v1643 = vunpack.c.l.b16 %v1555
          %v1644 = vunpack.c.h.b16 %v1555
          %v1645 = vunpack.c.l.b16 %v1556
          %v1646 = vunpack.c.h.b16 %v1556
          %v1647 = vunpack.c.l.b16 %v1557
          %v1648 = vunpack.c.h.b16 %v1557
          %v1649 = vunpack.c.l.b16 %v1558
          %v1650 = vunpack.c.h.b16 %v1558
          %v1651 = vunpack.c.l.b16 %v1559
          %v1652 = vunpack.c.h.b16 %v1559
          %v1653 = vunpack.c.l.b16 %v1560
          %v1654 = vunpack.c.h.b16 %v1560
          %v1655 = vunpack.c.l.b16 %v1561
          %v1656 = vunpack.c.h.b16 %v1561
          %v1657 = vunpack.c.l.b16 %v1562
          %v1658 = vunpack.c.h.b16 %v1562
          %v1659 = vunpack.c.l.b16 %v1563
          %v1660 = vunpack.c.h.b16 %v1563
          %v1661 = vunpack.c.l.b16 %v1564
          %v1662 = vunpack.c.h.b16 %v1564
          %v1663 = vunpack.c.l.b16 %v1565
          %v1664 = vunpack.c.h.b16 %v1565
          %v1665 = vunpack.c.l.b16 %v1566
          %v1666 = vunpack.c.h.b16 %v1566
          %v1667 = vunpack.c.l.b16 %v1567
          %v1668 = vunpack.c.h.b16 %v1567
          %v1669 = vunpack.c.l.b16 %v1568
          %v1670 = vunpack.c.h.b16 %v1568
          %v1671 = vunpack.c.l.b16 %v1569
          %v1672 = vunpack.c.h.b16 %v1569
          %v1673 = vunpack.c.l.b16 %v1570
          %v1674 = vunpack.c.h.b16 %v1570
          %v1675 = vunpack.c.l.b16 %v1571
          %v1676 = vunpack.c.h.b16 %v1571
          %v1677 = vunpack.c.l.b16 %v1572
          %v1678 = vunpack.c.h.b16 %v1572
          %v1679 = vunpack.c.l.b16 %v1573
          %v1680 = vunpack.c.h.b16 %v1573
          %v1681 = vunpack.c.l.b16 %v1574
          %v1682 = vunpack.c.h.b16 %v1574
          %v1683 = vunpack.c.l.b16 %v1575
          %v1684 = vunpack.c.h.b16 %v1575
          %v1685 = vunpack.c.l.b16 %v1576
          %v1686 = vunpack.c.h.b16 %v1576
          %v1687 = vunpack.c.l.b16 %v1577
          %v1688 = vunpack.c.h.b16 %v1577
          %v1689 = vunpack.c.l.b16 %v1578
          %v1690 = vunpack.c.h.b16 %v1578
          %v1691 = vunpack.c.l.b16 %v1579
          %v1692 = vunpack.c.h.b16 %v1579
          %v1693 = vunpack.c.l.b16 %v1580
          %v1694 = vunpack.c.h.b16 %v1580
          %v1695 = vunpack.c.l.b16 %v1581
          %v1696 = vunpack.c.h.b16 %v1581
          %v1697 = vunpack.c.l.b16 %v1582
          %v1698 = vunpack.c.h.b16 %v1582
          %v1699 = vunpack.c.l.b16 %v1583
          %v1700 = vunpack.c.h.b16 %v1583
          %v1701 = vunpack.c.l.b16 %v1584
          %v1702 = vunpack.c.h.b16 %v1584
          %v1703 = vpack.c.b16 %v1643, %v1639
          %v1704 = vpack.c.b16 %v1644, %v1640
          %v1705 = vpack.c.b16 %v1645, %v1641
          %v1706 = vpack.c.b16 %v1646, %v1642
          %v1707 = vpack.c.b16 %v1651, %v1647
          %v1708 = vpack.c.b16 %v1652, %v1648
          %v1709 = vpack.c.b16 %v1653, %v1649
          %v1710 = vpack.c.b16 %v1654, %v1650
          %v1711 = vpack.c.b16 %v1659, %v1655
          %v1712 = vpack.c.b16 %v1660, %v1656
          %v1713 = vpack.c.b16 %v1661, %v1657
          %v1714 = vpack.c.b16 %v1662, %v1658
          %v1715 = vpack.c.b16 %v1667, %v1663
          %v1716 = vpack.c.b16 %v1668, %v1664
          %v1717 = vpack.c.b16 %v1669, %v1665
          %v1718 = vpack.c.b16 %v1670, %v1666
          %v1719 = vpack.c.b16 %v1675, %v1671
          %v1720 = vpack.c.b16 %v1676, %v1672
          %v1721 = vpack.c.b16 %v1677, %v1673
          %v1722 = vpack.c.b16 %v1678, %v1674
          %v1723 = vpack.c.b16 %v1683, %v1679
          %v1724 = vpack.c.b16 %v1684, %v1680
          %v1725 = vpack.c.b16 %v1685, %v1681
          %v1726 = vpack.c.b16 %v1686, %v1682
          %v1727 = vpack.c.b16 %v1691, %v1687
          %v1728 = vpack.c.b16 %v1692, %v1688
          %v1729 = vpack.c.b16 %v1693, %v1689
          %v1730 = vpack.c.b16 %v1694, %v1690
          %v1731 = vpack.c.b16 %v1699, %v1695
          %v1732 = vpack.c.b16 %v1700, %v1696
          %v1733 = vpack.c.b16 %v1701, %v1697
          %v1734 = vpack.c.b16 %v1702, %v1698
          %1767 = vmatprep.subr.bf16.mxu0 %v1732
          %1768 = vmatpush1.bf16.msra.mxu0 %v1731
          %1769 = vmatprep.subr.bf16.mxu0 %v1728
          %1770 = vmatpush1.bf16.msra.mxu0 %v1727
          %1771 = vmatprep.subr.bf16.mxu0 %v1724
          %1772 = vmatpush1.bf16.msra.mxu0 %v1723
          %1773 = vmatprep.subr.bf16.mxu0 %v1720
          %1774 = vmatpush1.bf16.msra.mxu0 %v1719
          %1775 = vmatprep.subr.bf16.mxu0 %v1716
          %1776 = vmatpush1.bf16.msra.mxu0 %v1715
          %1777 = vmatprep.subr.bf16.mxu0 %v1712
          %1778 = vmatpush1.bf16.msra.mxu0 %v1711
          %1779 = vmatprep.subr.bf16.mxu0 %v1708
          %1780 = vmatpush1.bf16.msra.mxu0 %v1707
          %1781 = vmatprep.subr.bf16.mxu0 %v1704
          %1782 = vmatpush1.bf16.msra.mxu0 %v1703
          %1783 = vmatprep.subr.bf16.mxu0 0
          %1784 = vmatpush2.bf16.msra.mxu0 0
          %1785 = vmatprep.subr.bf16.mxu0 0
          %1786 = vmatpush2.bf16.msra.mxu0 0
          %1787 = vmatprep.subr.bf16.mxu0 0
          %1788 = vmatpush2.bf16.msra.mxu0 0
          %1789 = vmatprep.subr.bf16.mxu0 0
          %1790 = vmatpush2.bf16.msra.mxu0 0
          %1791 = vmatprep.subr.bf16.mxu0 0
          %1792 = vmatpush2.bf16.msra.mxu0 0
          %1793 = vmatprep.subr.bf16.mxu0 0
          %1794 = vmatpush2.bf16.msra.mxu0 0
          %1795 = vmatprep.subr.bf16.mxu0 0
          %1796 = vmatpush2.bf16.msra.mxu0 0
          %1797 = vmatprep.subr.bf16.mxu0 0
          %1798 = vmatpush2.bf16.msra.mxu0 0
          %1799 = vmatprep.mubr.bf16.mxu0 0
          %1800 = vmatmul.mubr.bf16.gmra.mxu0 %v1549
          %v1801 = vpop.f32.mrf.mxu0
          %v1802 = vadd.f32 %v1590, %v1801
          %v1803 = vpop.f32.mrf.mxu0
          %v1804 = vadd.f32 %v1594, %v1803
          %v1805 = vpop.f32.mrf.mxu0
          %v1806 = vadd.f32 %v1590, %v1805
          %v1807 = vpop.f32.mrf.mxu0
          %v1808 = vadd.f32 %v1594, %v1807
          %1809 = vmatprep.mubr.bf16.mxu0 0
          %1810 = vmatmul.mubr.bf16.gmra.mxu0 %v1550
          %v1811 = vpop.f32.mrf.mxu0
          %v1812 = vadd.f32 %v1590, %v1811
          %v1813 = vpop.f32.mrf.mxu0
          %v1814 = vadd.f32 %v1594, %v1813
          %v1815 = vpop.f32.mrf.mxu0
          %v1816 = vadd.f32 %v1590, %v1815
          %v1817 = vpop.f32.mrf.mxu0
          %v1818 = vadd.f32 %v1594, %v1817
          %1819 = vmatprep.mubr.bf16.mxu0 0
          %1820 = vmatmul.mubr.bf16.gmra.mxu0 %v1551
          %v1821 = vpop.f32.mrf.mxu0
          %v1822 = vadd.f32 %v1590, %v1821
          %v1823 = vpop.f32.mrf.mxu0
          %v1824 = vadd.f32 %v1594, %v1823
          %v1825 = vpop.f32.mrf.mxu0
          %v1826 = vadd.f32 %v1590, %v1825
          %v1827 = vpop.f32.mrf.mxu0
          %v1828 = vadd.f32 %v1594, %v1827
          %1829 = vmatprep.mubr.bf16.mxu0 0
          %1830 = vmatmul.mubr.bf16.gmra.mxu0 %v1552
          %v1831 = vpop.f32.mrf.mxu0
          %v1832 = vadd.f32 %v1590, %v1831
          %v1833 = vpop.f32.mrf.mxu0
          %v1834 = vadd.f32 %v1594, %v1833
          %v1835 = vpop.f32.mrf.mxu0
          %v1836 = vadd.f32 %v1590, %v1835
          %v1837 = vpop.f32.mrf.mxu0
          %v1838 = vadd.f32 %v1594, %v1837
          %1839 = vdwg.mxu0
          %1840 = vmatprep.subr.bf16.mxu0 %v1734
          %1841 = vmatpush1.bf16.msra.mxu0 %v1733
          %1842 = vmatprep.subr.bf16.mxu0 %v1730
          %1843 = vmatpush1.bf16.msra.mxu0 %v1729
          %1844 = vmatprep.subr.bf16.mxu0 %v1726
          %1845 = vmatpush1.bf16.msra.mxu0 %v1725
          %1846 = vmatprep.subr.bf16.mxu0 %v1722
          %1847 = vmatpush1.bf16.msra.mxu0 %v1721
          %1848 = vmatprep.subr.bf16.mxu0 %v1718
          %1849 = vmatpush1.bf16.msra.mxu0 %v1717
          %1850 = vmatprep.subr.bf16.mxu0 %v1714
          %1851 = vmatpush1.bf16.msra.mxu0 %v1713
          %1852 = vmatprep.subr.bf16.mxu0 %v1710
          %1853 = vmatpush1.bf16.msra.mxu0 %v1709
          %1854 = vmatprep.subr.bf16.mxu0 %v1706
          %1855 = vmatpush1.bf16.msra.mxu0 %v1705
          %1856 = vmatprep.subr.bf16.mxu0 0
          %1857 = vmatpush2.bf16.msra.mxu0 0
          %1858 = vmatprep.subr.bf16.mxu0 0
          %1859 = vmatpush2.bf16.msra.mxu0 0
          %1860 = vmatprep.subr.bf16.mxu0 0
          %1861 = vmatpush2.bf16.msra.mxu0 0
          %1862 = vmatprep.subr.bf16.mxu0 0
          %1863 = vmatpush2.bf16.msra.mxu0 0
          %1864 = vmatprep.subr.bf16.mxu0 0
          %1865 = vmatpush2.bf16.msra.mxu0 0
          %1866 = vmatprep.subr.bf16.mxu0 0
          %1867 = vmatpush2.bf16.msra.mxu0 0
          %1868 = vmatprep.subr.bf16.mxu0 0
          %1869 = vmatpush2.bf16.msra.mxu0 0
          %1870 = vmatprep.subr.bf16.mxu0 0
          %1871 = vmatpush2.bf16.msra.mxu0 0
          %1872 = vmatprep.mubr.bf16.mxu0 0
          %1873 = vmatmul.mubr.bf16.gmra.mxu0 %v1549
          %v1874 = vpop.f32.mrf.mxu0
          %v1875 = vadd.f32 %v1598, %v1874
          %v1876 = vpop.f32.mrf.mxu0
          %v1877 = vadd.f32 %v1602, %v1876
          %v1878 = vpop.f32.mrf.mxu0
          %v1879 = vadd.f32 %v1598, %v1878
          %v1880 = vpop.f32.mrf.mxu0
          %v1881 = vadd.f32 %v1602, %v1880
          %1882 = vmatprep.mubr.bf16.mxu0 0
          %1883 = vmatmul.mubr.bf16.gmra.mxu0 %v1550
          %v1884 = vpop.f32.mrf.mxu0
          %v1885 = vadd.f32 %v1598, %v1884
          %v1886 = vpop.f32.mrf.mxu0
          %v1887 = vadd.f32 %v1602, %v1886
          %v1888 = vpop.f32.mrf.mxu0
          %v1889 = vadd.f32 %v1598, %v1888
          %v1890 = vpop.f32.mrf.mxu0
          %v1891 = vadd.f32 %v1602, %v1890
          %1892 = vmatprep.mubr.bf16.mxu0 0
          %1893 = vmatmul.mubr.bf16.gmra.mxu0 %v1551
          %v1894 = vpop.f32.mrf.mxu0
          %v1895 = vadd.f32 %v1598, %v1894
          %v1896 = vpop.f32.mrf.mxu0
          %v1897 = vadd.f32 %v1602, %v1896
          %v1898 = vpop.f32.mrf.mxu0
          %v1899 = vadd.f32 %v1598, %v1898
          %v1900 = vpop.f32.mrf.mxu0
          %v1901 = vadd.f32 %v1602, %v1900
          %1902 = vmatprep.mubr.bf16.mxu0 0
          %1903 = vmatmul.mubr.bf16.gmra.mxu0 %v1552
          %v1904 = vpop.f32.mrf.mxu0
          %v1905 = vadd.f32 %v1598, %v1904
          %v1906 = vpop.f32.mrf.mxu0
          %v1907 = vadd.f32 %v1602, %v1906
          %v1908 = vpop.f32.mrf.mxu0
          %v1909 = vadd.f32 %v1598, %v1908
          %v1910 = vpop.f32.mrf.mxu0
          %v1911 = vadd.f32 %v1602, %v1910
          %1912 = vdwg.mxu0
          %v1913 = vmax.f32 %v1802, 0.0
          %v1914 = vmax.f32 %v1804, 0.0
          %v1915 = vmax.f32 %v1875, 0.0
          %v1916 = vmax.f32 %v1877, 0.0
          %v1917 = vmax.f32 %v1806, 0.0
          %v1918 = vmax.f32 %v1808, 0.0
          %v1919 = vmax.f32 %v1879, 0.0
          %v1920 = vmax.f32 %v1881, 0.0
          %v1921 = vmax.f32 %v1812, 0.0
          %v1922 = vmax.f32 %v1814, 0.0
          %v1923 = vmax.f32 %v1885, 0.0
          %v1924 = vmax.f32 %v1887, 0.0
          %v1925 = vmax.f32 %v1816, 0.0
          %v1926 = vmax.f32 %v1818, 0.0
          %v1927 = vmax.f32 %v1889, 0.0
          %v1928 = vmax.f32 %v1891, 0.0
          %v1929 = vmax.f32 %v1822, 0.0
          %v1930 = vmax.f32 %v1824, 0.0
          %v1931 = vmax.f32 %v1895, 0.0
          %v1932 = vmax.f32 %v1897, 0.0
          %v1933 = vmax.f32 %v1826, 0.0
          %v1934 = vmax.f32 %v1828, 0.0
          %v1935 = vmax.f32 %v1899, 0.0
          %v1936 = vmax.f32 %v1901, 0.0
          %v1937 = vmax.f32 %v1832, 0.0
          %v1938 = vmax.f32 %v1834, 0.0
          %v1939 = vmax.f32 %v1905, 0.0
          %v1940 = vmax.f32 %v1907, 0.0
          %v1941 = vmax.f32 %v1836, 0.0
          %v1942 = vmax.f32 %v1838, 0.0
          %v1943 = vmax.f32 %v1909, 0.0
          %v1944 = vmax.f32 %v1911, 0.0
          %v1945 = vpack.c.bf16 %v1917, %v1913
          %v1946 = vpack.c.bf16 %v1918, %v1914
          %v1947 = vpack.c.bf16 %v1919, %v1915
          %v1948 = vpack.c.bf16 %v1920, %v1916
          %v1949 = vpack.c.bf16 %v1925, %v1921
          %v1950 = vpack.c.bf16 %v1926, %v1922
          %v1951 = vpack.c.bf16 %v1927, %v1923
          %v1952 = vpack.c.bf16 %v1928, %v1924
          %v1953 = vpack.c.bf16 %v1933, %v1929
          %v1954 = vpack.c.bf16 %v1934, %v1930
          %v1955 = vpack.c.bf16 %v1935, %v1931
          %v1956 = vpack.c.bf16 %v1936, %v1932
          %v1957 = vpack.c.bf16 %v1941, %v1937
          %v1958 = vpack.c.bf16 %v1942, %v1938
          %v1959 = vpack.c.bf16 %v1943, %v1939
          %v1960 = vpack.c.bf16 %v1944, %v1940
          %v1961 = vld [vmem:[#allocation15] sm:$0xf]
          %v1962 = vld [vmem:[#allocation15 + $0x4] sm:$0xf]
          %v1963 = vld [vmem:[#allocation15 + $0x8] sm:$0xf]
          %v1964 = vld [vmem:[#allocation15 + $0xc] sm:$0xf]
          %v1965 = vld [vmem:[#allocation15 + $0x10] sm:$0xf]
          %v1966 = vld [vmem:[#allocation15 + $0x14] sm:$0xf]
          %v1967 = vld [vmem:[#allocation15 + $0x18] sm:$0xf]
          %v1968 = vld [vmem:[#allocation15 + $0x1c] sm:$0xf]
          %v1969 = vld [vmem:[#allocation15 + $0x20] sm:$0xf]
          %v1970 = vld [vmem:[#allocation15 + $0x24] sm:$0xf]
          %v1971 = vld [vmem:[#allocation15 + $0x28] sm:$0xf]
          %v1972 = vld [vmem:[#allocation15 + $0x2c] sm:$0xf]
          %v1973 = vld [vmem:[#allocation15 + $0x30] sm:$0xf]
          %v1974 = vld [vmem:[#allocation15 + $0x34] sm:$0xf]
          %v1975 = vld [vmem:[#allocation15 + $0x38] sm:$0xf]
          %v1976 = vld [vmem:[#allocation15 + $0x3c] sm:$0xf]
          %v1977 = vld [vmem:[#allocation15 + $0x40] sm:$0xf]
          %v1978 = vld [vmem:[#allocation15 + $0x44] sm:$0xf]
          %v1979 = vld [vmem:[#allocation15 + $0x48] sm:$0xf]
          %v1980 = vld [vmem:[#allocation15 + $0x4c] sm:$0xf]
          %v1981 = vld [vmem:[#allocation15 + $0x50] sm:$0xf]
          %v1982 = vld [vmem:[#allocation15 + $0x54] sm:$0xf]
          %v1983 = vld [vmem:[#allocation15 + $0x58] sm:$0xf]
          %v1984 = vld [vmem:[#allocation15 + $0x5c] sm:$0xf]
          %v1985 = vld [vmem:[#allocation15 + $0x60] sm:$0xf]
          %v1986 = vld [vmem:[#allocation15 + $0x64] sm:$0xf]
          %v1987 = vld [vmem:[#allocation15 + $0x68] sm:$0xf]
          %v1988 = vld [vmem:[#allocation15 + $0x6c] sm:$0xf]
          %v1989 = vld [vmem:[#allocation15 + $0x70] sm:$0xf]
          %v1990 = vld [vmem:[#allocation15 + $0x74] sm:$0xf]
          %v1991 = vld [vmem:[#allocation15 + $0x78] sm:$0xf]
          %v1992 = vld [vmem:[#allocation15 + $0x7c] sm:$0xf]
          %v1993 = vld [vmem:[#allocation15 + $0x80] sm:$0xf]
          %v1994 = vld [vmem:[#allocation15 + $0x84] sm:$0xf]
          %v1995 = vld [vmem:[#allocation15 + $0x88] sm:$0xf]
          %v1996 = vld [vmem:[#allocation15 + $0x8c] sm:$0xf]
          %v1997 = vld [vmem:[#allocation15 + $0x90] sm:$0xf]
          %v1998 = vld [vmem:[#allocation15 + $0x94] sm:$0xf]
          %v1999 = vld [vmem:[#allocation15 + $0x98] sm:$0xf]
          %v2000 = vld [vmem:[#allocation15 + $0x9c] sm:$0xf]
          %v2001 = vld [vmem:[#allocation15 + $0xa0] sm:$0xf]
          %v2002 = vld [vmem:[#allocation15 + $0xa4] sm:$0xf]
          %v2003 = vld [vmem:[#allocation15 + $0xa8] sm:$0xf]
          %v2004 = vld [vmem:[#allocation15 + $0xac] sm:$0xf]
          %v2005 = vld [vmem:[#allocation15 + $0xb0] sm:$0xf]
          %v2006 = vld [vmem:[#allocation15 + $0xb4] sm:$0xf]
          %v2007 = vld [vmem:[#allocation15 + $0xb8] sm:$0xf]
          %v2008 = vld [vmem:[#allocation15 + $0xbc] sm:$0xf]
          %v2009 = vld [vmem:[#allocation15 + $0xc0] sm:$0xf]
          %v2010 = vld [vmem:[#allocation15 + $0xc4] sm:$0xf]
          %v2011 = vld [vmem:[#allocation15 + $0xc8] sm:$0xf]
          %v2012 = vld [vmem:[#allocation15 + $0xcc] sm:$0xf]
          %v2013 = vld [vmem:[#allocation15 + $0xd0] sm:$0xf]
          %v2014 = vld [vmem:[#allocation15 + $0xd4] sm:$0xf]
          %v2015 = vld [vmem:[#allocation15 + $0xd8] sm:$0xf]
          %v2016 = vld [vmem:[#allocation15 + $0xdc] sm:$0xf]
          %v2017 = vld [vmem:[#allocation15 + $0xe0] sm:$0xf]
          %v2018 = vld [vmem:[#allocation15 + $0xe4] sm:$0xf]
          %v2019 = vld [vmem:[#allocation15 + $0xe8] sm:$0xf]
          %v2020 = vld [vmem:[#allocation15 + $0xec] sm:$0xf]
          %v2021 = vld [vmem:[#allocation15 + $0xf0] sm:$0xf]
          %v2022 = vld [vmem:[#allocation15 + $0xf4] sm:$0xf]
          %v2023 = vld [vmem:[#allocation15 + $0xf8] sm:$0xf]
          %v2024 = vld [vmem:[#allocation15 + $0xfc] sm:$0xf]
          %v2025 = vld [vmem:[%s9] sm:$0x1]
          %v2027 = vlaneseq
          %v2028 = vshrl.u32 %v2027, 7
          %v2029 = vsub.s32 0, %v2028
          %v2030 = vrot.slane %v2025, %v2029
          %v2096 = vunpack.c.l.b16 %v1961
          %v2097 = vunpack.c.l.b16 %v1962
          %v2098 = vunpack.c.l.b16 %v1963
          %v2099 = vunpack.c.l.b16 %v1964
          %v2100 = vunpack.c.l.b16 %v1965
          %v2101 = vunpack.c.l.b16 %v1966
          %v2102 = vunpack.c.l.b16 %v1967
          %v2103 = vunpack.c.l.b16 %v1968
          %v2104 = vunpack.c.l.b16 %v1969
          %v2105 = vunpack.c.l.b16 %v1970
          %v2106 = vunpack.c.l.b16 %v1971
          %v2107 = vunpack.c.l.b16 %v1972
          %v2108 = vunpack.c.l.b16 %v1973
          %v2109 = vunpack.c.l.b16 %v1974
          %v2110 = vunpack.c.l.b16 %v1975
          %v2111 = vunpack.c.l.b16 %v1976
          %v2112 = vunpack.c.l.b16 %v1977
          %v2113 = vunpack.c.l.b16 %v1978
          %v2114 = vunpack.c.l.b16 %v1979
          %v2115 = vunpack.c.l.b16 %v1980
          %v2116 = vunpack.c.l.b16 %v1981
          %v2117 = vunpack.c.l.b16 %v1982
          %v2118 = vunpack.c.l.b16 %v1983
          %v2119 = vunpack.c.l.b16 %v1984
          %v2120 = vunpack.c.l.b16 %v1985
          %v2121 = vunpack.c.l.b16 %v1986
          %v2122 = vunpack.c.l.b16 %v1987
          %v2123 = vunpack.c.l.b16 %v1988
          %v2124 = vunpack.c.l.b16 %v1989
          %v2125 = vunpack.c.l.b16 %v1990
          %v2126 = vunpack.c.l.b16 %v1991
          %v2127 = vunpack.c.l.b16 %v1992
          %v2128 = vunpack.c.l.b16 %v1993
          %v2129 = vunpack.c.l.b16 %v1994
          %v2130 = vunpack.c.l.b16 %v1995
          %v2131 = vunpack.c.l.b16 %v1996
          %v2132 = vunpack.c.l.b16 %v1997
          %v2133 = vunpack.c.l.b16 %v1998
          %v2134 = vunpack.c.l.b16 %v1999
          %v2135 = vunpack.c.l.b16 %v2000
          %v2136 = vunpack.c.l.b16 %v2001
          %v2137 = vunpack.c.l.b16 %v2002
          %v2138 = vunpack.c.l.b16 %v2003
          %v2139 = vunpack.c.l.b16 %v2004
          %v2140 = vunpack.c.l.b16 %v2005
          %v2141 = vunpack.c.l.b16 %v2006
          %v2142 = vunpack.c.l.b16 %v2007
          %v2143 = vunpack.c.l.b16 %v2008
          %v2144 = vunpack.c.l.b16 %v2009
          %v2145 = vunpack.c.l.b16 %v2010
          %v2146 = vunpack.c.l.b16 %v2011
          %v2147 = vunpack.c.l.b16 %v2012
          %v2148 = vunpack.c.l.b16 %v2013
          %v2149 = vunpack.c.l.b16 %v2014
          %v2150 = vunpack.c.l.b16 %v2015
          %v2151 = vunpack.c.l.b16 %v2016
          %v2152 = vunpack.c.l.b16 %v2017
          %v2153 = vunpack.c.l.b16 %v2018
          %v2154 = vunpack.c.l.b16 %v2019
          %v2155 = vunpack.c.l.b16 %v2020
          %v2156 = vunpack.c.l.b16 %v2021
          %v2157 = vunpack.c.l.b16 %v2022
          %v2158 = vunpack.c.l.b16 %v2023
          %v2159 = vunpack.c.l.b16 %v2024
          %v2160 = vpack.c.b16 %v2097, %v2096
          %v2161 = vpack.c.b16 %v2099, %v2098
          %v2162 = vpack.c.b16 %v2101, %v2100
          %v2163 = vpack.c.b16 %v2103, %v2102
          %v2164 = vpack.c.b16 %v2105, %v2104
          %v2165 = vpack.c.b16 %v2107, %v2106
          %v2166 = vpack.c.b16 %v2109, %v2108
          %v2167 = vpack.c.b16 %v2111, %v2110
          %v2168 = vpack.c.b16 %v2113, %v2112
          %v2169 = vpack.c.b16 %v2115, %v2114
          %v2170 = vpack.c.b16 %v2117, %v2116
          %v2171 = vpack.c.b16 %v2119, %v2118
          %v2172 = vpack.c.b16 %v2121, %v2120
          %v2173 = vpack.c.b16 %v2123, %v2122
          %v2174 = vpack.c.b16 %v2125, %v2124
          %v2175 = vpack.c.b16 %v2127, %v2126
          %v2176 = vpack.c.b16 %v2129, %v2128
          %v2177 = vpack.c.b16 %v2131, %v2130
          %v2178 = vpack.c.b16 %v2133, %v2132
          %v2179 = vpack.c.b16 %v2135, %v2134
          %v2180 = vpack.c.b16 %v2137, %v2136
          %v2181 = vpack.c.b16 %v2139, %v2138
          %v2182 = vpack.c.b16 %v2141, %v2140
          %v2183 = vpack.c.b16 %v2143, %v2142
          %v2184 = vpack.c.b16 %v2145, %v2144
          %v2185 = vpack.c.b16 %v2147, %v2146
          %v2186 = vpack.c.b16 %v2149, %v2148
          %v2187 = vpack.c.b16 %v2151, %v2150
          %v2188 = vpack.c.b16 %v2153, %v2152
          %v2189 = vpack.c.b16 %v2155, %v2154
          %v2190 = vpack.c.b16 %v2157, %v2156
          %v2191 = vpack.c.b16 %v2159, %v2158
          %2224 = vmatprep.subr.bf16.mxu0 0
          %2225 = vmatpush1.bf16.msra.mxu0 %v2167
          %2226 = vmatprep.subr.bf16.mxu0 0
          %2227 = vmatpush1.bf16.msra.mxu0 %v2166
          %2228 = vmatprep.subr.bf16.mxu0 0
          %2229 = vmatpush1.bf16.msra.mxu0 %v2165
          %2230 = vmatprep.subr.bf16.mxu0 0
          %2231 = vmatpush1.bf16.msra.mxu0 %v2164
          %2232 = vmatprep.subr.bf16.mxu0 0
          %2233 = vmatpush1.bf16.msra.mxu0 %v2163
          %2234 = vmatprep.subr.bf16.mxu0 0
          %2235 = vmatpush1.bf16.msra.mxu0 %v2162
          %2236 = vmatprep.subr.bf16.mxu0 0
          %2237 = vmatpush1.bf16.msra.mxu0 %v2161
          %2238 = vmatprep.subr.bf16.mxu0 0
          %2239 = vmatpush1.bf16.msra.mxu0 %v2160
          %2240 = vmatprep.subr.bf16.mxu0 0
          %2241 = vmatpush2.bf16.msra.mxu0 %v2175
          %2242 = vmatprep.subr.bf16.mxu0 0
          %2243 = vmatpush2.bf16.msra.mxu0 %v2174
          %2244 = vmatprep.subr.bf16.mxu0 0
          %2245 = vmatpush2.bf16.msra.mxu0 %v2173
          %2246 = vmatprep.subr.bf16.mxu0 0
          %2247 = vmatpush2.bf16.msra.mxu0 %v2172
          %2248 = vmatprep.subr.bf16.mxu0 0
          %2249 = vmatpush2.bf16.msra.mxu0 %v2171
          %2250 = vmatprep.subr.bf16.mxu0 0
          %2251 = vmatpush2.bf16.msra.mxu0 %v2170
          %2252 = vmatprep.subr.bf16.mxu0 0
          %2253 = vmatpush2.bf16.msra.mxu0 %v2169
          %2254 = vmatprep.subr.bf16.mxu0 0
          %2255 = vmatpush2.bf16.msra.mxu0 %v2168
          %2256 = vmatprep.mubr.bf16.mxu0 %v1946
          %2257 = vmatmul.mubr.bf16.gmra.mxu0 %v1945
          %v2258 = vpop.f32.mrf.mxu0
          %v2259 = vadd.f32 %v2030, %v2258
          %v2260 = vpop.f32.mrf.mxu0
          %v2261 = vpop.f32.mrf.mxu0
          %v2262 = vadd.f32 %v2030, %v2261
          %v2263 = vpop.f32.mrf.mxu0
          %2264 = vmatprep.mubr.bf16.mxu0 %v1950
          %2265 = vmatmul.mubr.bf16.gmra.mxu0 %v1949
          %v2266 = vpop.f32.mrf.mxu0
          %v2267 = vadd.f32 %v2030, %v2266
          %v2268 = vpop.f32.mrf.mxu0
          %v2269 = vpop.f32.mrf.mxu0
          %v2270 = vadd.f32 %v2030, %v2269
          %v2271 = vpop.f32.mrf.mxu0
          %2272 = vmatprep.mubr.bf16.mxu0 %v1954
          %2273 = vmatmul.mubr.bf16.gmra.mxu0 %v1953
          %v2274 = vpop.f32.mrf.mxu0
          %v2275 = vadd.f32 %v2030, %v2274
          %v2276 = vpop.f32.mrf.mxu0
          %v2277 = vpop.f32.mrf.mxu0
          %v2278 = vadd.f32 %v2030, %v2277
          %v2279 = vpop.f32.mrf.mxu0
          %2280 = vmatprep.mubr.bf16.mxu0 %v1958
          %2281 = vmatmul.mubr.bf16.gmra.mxu0 %v1957
          %v2282 = vpop.f32.mrf.mxu0
          %v2283 = vadd.f32 %v2030, %v2282
          %v2284 = vpop.f32.mrf.mxu0
          %v2285 = vpop.f32.mrf.mxu0
          %v2286 = vadd.f32 %v2030, %v2285
          %v2287 = vpop.f32.mrf.mxu0
          %2288 = vdwg.mxu0
          %2289 = vmatprep.subr.bf16.mxu0 0
          %2290 = vmatpush1.bf16.msra.mxu0 %v2183
          %2291 = vmatprep.subr.bf16.mxu0 0
          %2292 = vmatpush1.bf16.msra.mxu0 %v2182
          %2293 = vmatprep.subr.bf16.mxu0 0
          %2294 = vmatpush1.bf16.msra.mxu0 %v2181
          %2295 = vmatprep.subr.bf16.mxu0 0
          %2296 = vmatpush1.bf16.msra.mxu0 %v2180
          %2297 = vmatprep.subr.bf16.mxu0 0
          %2298 = vmatpush1.bf16.msra.mxu0 %v2179
          %2299 = vmatprep.subr.bf16.mxu0 0
          %2300 = vmatpush1.bf16.msra.mxu0 %v2178
          %2301 = vmatprep.subr.bf16.mxu0 0
          %2302 = vmatpush1.bf16.msra.mxu0 %v2177
          %2303 = vmatprep.subr.bf16.mxu0 0
          %2304 = vmatpush1.bf16.msra.mxu0 %v2176
          %2305 = vmatprep.subr.bf16.mxu0 0
          %2306 = vmatpush2.bf16.msra.mxu0 %v2191
          %2307 = vmatprep.subr.bf16.mxu0 0
          %2308 = vmatpush2.bf16.msra.mxu0 %v2190
          %2309 = vmatprep.subr.bf16.mxu0 0
          %2310 = vmatpush2.bf16.msra.mxu0 %v2189
          %2311 = vmatprep.subr.bf16.mxu0 0
          %2312 = vmatpush2.bf16.msra.mxu0 %v2188
          %2313 = vmatprep.subr.bf16.mxu0 0
          %2314 = vmatpush2.bf16.msra.mxu0 %v2187
          %2315 = vmatprep.subr.bf16.mxu0 0
          %2316 = vmatpush2.bf16.msra.mxu0 %v2186
          %2317 = vmatprep.subr.bf16.mxu0 0
          %2318 = vmatpush2.bf16.msra.mxu0 %v2185
          %2319 = vmatprep.subr.bf16.mxu0 0
          %2320 = vmatpush2.bf16.msra.mxu0 %v2184
          %2321 = vmatprep.mubr.bf16.mxu0 %v1948
          %2322 = vmatmul.mubr.bf16.gmra.mxu0 %v1947
          %v2323 = vpop.f32.mrf.mxu0
          %v2324 = vadd.f32 %v2259, %v2323
          %v2325 = vpop.f32.mrf.mxu0
          %v2326 = vpop.f32.mrf.mxu0
          %v2327 = vadd.f32 %v2262, %v2326
          %v2328 = vpop.f32.mrf.mxu0
          %2329 = vmatprep.mubr.bf16.mxu0 %v1952
          %2330 = vmatmul.mubr.bf16.gmra.mxu0 %v1951
          %v2331 = vpop.f32.mrf.mxu0
          %v2332 = vadd.f32 %v2267, %v2331
          %v2333 = vpop.f32.mrf.mxu0
          %v2334 = vpop.f32.mrf.mxu0
          %v2335 = vadd.f32 %v2270, %v2334
          %v2336 = vpop.f32.mrf.mxu0
          %2337 = vmatprep.mubr.bf16.mxu0 %v1956
          %2338 = vmatmul.mubr.bf16.gmra.mxu0 %v1955
          %v2339 = vpop.f32.mrf.mxu0
          %v2340 = vadd.f32 %v2275, %v2339
          %v2341 = vpop.f32.mrf.mxu0
          %v2342 = vpop.f32.mrf.mxu0
          %v2343 = vadd.f32 %v2278, %v2342
          %v2344 = vpop.f32.mrf.mxu0
          %2345 = vmatprep.mubr.bf16.mxu0 %v1960
          %2346 = vmatmul.mubr.bf16.gmra.mxu0 %v1959
          %v2347 = vpop.f32.mrf.mxu0
          %v2348 = vadd.f32 %v2283, %v2347
          %v2349 = vpop.f32.mrf.mxu0
          %v2350 = vpop.f32.mrf.mxu0
          %v2351 = vadd.f32 %v2286, %v2350
          %v2352 = vpop.f32.mrf.mxu0
          %2353 = vdwg.mxu0
          %v2354 = vadd.f32 %v1541, %v2324
          %v2355 = vadd.f32 %v1542, %v2327
          %v2356 = vadd.f32 %v1543, %v2332
          %v2357 = vadd.f32 %v1544, %v2335
          %v2358 = vadd.f32 %v1545, %v2340
          %v2359 = vadd.f32 %v1546, %v2343
          %v2360 = vadd.f32 %v1547, %v2348
          %v2361 = vadd.f32 %v1548, %v2351
          %v2362 = vadd.f32 %v2354, %v2355
          %v2363 = vrot.slane %v2362, 4
          %v2364 = vadd.f32 %v2362, %v2363
          %v2365 = vrot.slane %v2364, 2
          %v2366 = vadd.f32 %v2364, %v2365
          %v2367 = vrot.slane %v2366, 1
          %v2368 = vadd.f32 %v2366, %v2367
          %v2369 = vadd.f32 %v2356, %v2357
          %v2370 = vrot.slane %v2369, 4
          %v2371 = vadd.f32 %v2369, %v2370
          %v2372 = vrot.slane %v2371, 2
          %v2373 = vadd.f32 %v2371, %v2372
          %v2374 = vrot.slane %v2373, 1
          %v2375 = vadd.f32 %v2373, %v2374
          %v2376 = vadd.f32 %v2358, %v2359
          %v2377 = vrot.slane %v2376, 4
          %v2378 = vadd.f32 %v2376, %v2377
          %v2379 = vrot.slane %v2378, 2
          %v2380 = vadd.f32 %v2378, %v2379
          %v2381 = vrot.slane %v2380, 1
          %v2382 = vadd.f32 %v2380, %v2381
          %v2383 = vadd.f32 %v2360, %v2361
          %v2384 = vrot.slane %v2383, 4
          %v2385 = vadd.f32 %v2383, %v2384
          %v2386 = vrot.slane %v2385, 2
          %v2387 = vadd.f32 %v2385, %v2386
          %v2388 = vrot.slane %v2387, 1
          %v2389 = vadd.f32 %v2387, %v2388
          %v2390 = vmul.f32 %v2368, %v1442
          %v2391 = vmul.f32 %v2375, %v1442
          %v2392 = vmul.f32 %v2382, %v1442
          %v2393 = vmul.f32 %v2389, %v1442
          %v2394 = vmul.f32 %v2354, %v2354
          %v2395 = vmul.f32 %v2355, %v2355
          %v2396 = vmul.f32 %v2356, %v2356
          %v2397 = vmul.f32 %v2357, %v2357
          %v2398 = vmul.f32 %v2358, %v2358
          %v2399 = vmul.f32 %v2359, %v2359
          %v2400 = vmul.f32 %v2360, %v2360
          %v2401 = vmul.f32 %v2361, %v2361
          %v2402 = vadd.f32 %v2394, %v2395
          %v2403 = vrot.slane %v2402, 4
          %v2404 = vadd.f32 %v2402, %v2403
          %v2405 = vrot.slane %v2404, 2
          %v2406 = vadd.f32 %v2404, %v2405
          %v2407 = vrot.slane %v2406, 1
          %v2408 = vadd.f32 %v2406, %v2407
          %v2409 = vadd.f32 %v2396, %v2397
          %v2410 = vrot.slane %v2409, 4
          %v2411 = vadd.f32 %v2409, %v2410
          %v2412 = vrot.slane %v2411, 2
          %v2413 = vadd.f32 %v2411, %v2412
          %v2414 = vrot.slane %v2413, 1
          %v2415 = vadd.f32 %v2413, %v2414
          %v2416 = vadd.f32 %v2398, %v2399
          %v2417 = vrot.slane %v2416, 4
          %v2418 = vadd.f32 %v2416, %v2417
          %v2419 = vrot.slane %v2418, 2
          %v2420 = vadd.f32 %v2418, %v2419
          %v2421 = vrot.slane %v2420, 1
          %v2422 = vadd.f32 %v2420, %v2421
          %v2423 = vadd.f32 %v2400, %v2401
          %v2424 = vrot.slane %v2423, 4
          %v2425 = vadd.f32 %v2423, %v2424
          %v2426 = vrot.slane %v2425, 2
          %v2427 = vadd.f32 %v2425, %v2426
          %v2428 = vrot.slane %v2427, 1
          %v2429 = vadd.f32 %v2427, %v2428
          %v2430 = vmul.f32 %v2408, %v1442
          %v2431 = vmul.f32 %v2415, %v1442
          %v2432 = vmul.f32 %v2422, %v1442
          %v2433 = vmul.f32 %v2429, %v1442
          %v2434 = vmul.f32 %v2390, %v2390
          %v2435 = vmul.f32 %v2391, %v2391
          %v2436 = vmul.f32 %v2392, %v2392
          %v2437 = vmul.f32 %v2393, %v2393
          %v2438 = vsub.f32 %v2430, %v2434
          %v2439 = vsub.f32 %v2431, %v2435
          %v2440 = vsub.f32 %v2432, %v2436
          %v2441 = vsub.f32 %v2433, %v2437
          %v2442 = vsub.f32 %v2354, %v2390
          %v2443 = vsub.f32 %v2355, %v2390
          %v2444 = vsub.f32 %v2356, %v2391
          %v2445 = vsub.f32 %v2357, %v2391
          %v2446 = vsub.f32 %v2358, %v2392
          %v2447 = vsub.f32 %v2359, %v2392
          %v2448 = vsub.f32 %v2360, %v2393
          %v2449 = vsub.f32 %v2361, %v2393
          %v2450 = vadd.f32 %v2438, 1e-05
          %v2451 = vadd.f32 %v2439, 1e-05
          %v2452 = vadd.f32 %v2440, 1e-05
          %v2453 = vadd.f32 %v2441, 1e-05
          %v2454 = vrsqrt.pop %v2450
          %v2455 = vrsqrt.pop %v2451
          %v2456 = vrsqrt.pop %v2452
          %v2457 = vrsqrt.pop %v2453
          %v2458 = vmul.f32 %v2442, %v2454
          %v2459 = vmul.f32 %v2443, %v2454
          %v2460 = vmul.f32 %v2444, %v2455
          %v2461 = vmul.f32 %v2445, %v2455
          %v2462 = vmul.f32 %v2446, %v2456
          %v2463 = vmul.f32 %v2447, %v2456
          %v2464 = vmul.f32 %v2448, %v2457
          %v2465 = vmul.f32 %v2449, %v2457
          %v2466 = vld [vmem:[%s10] sm:$0x1]
          %v2468 = vlaneseq
          %v2469 = vshrl.u32 %v2468, 7
          %v2470 = vsub.s32 0, %v2469
          %v2471 = vrot.slane %v2466, %v2470
          %v2473 = vmul.f32 %v2458, %v2471
          %v2474 = vmul.f32 %v2459, %v2471
          %v2475 = vmul.f32 %v2460, %v2471
          %v2476 = vmul.f32 %v2461, %v2471
          %v2477 = vmul.f32 %v2462, %v2471
          %v2478 = vmul.f32 %v2463, %v2471
          %v2479 = vmul.f32 %v2464, %v2471
          %v2480 = vmul.f32 %v2465, %v2471
          %v2481 = vld [vmem:[%s11] sm:$0x1]
          %v2483 = vlaneseq
          %v2484 = vshrl.u32 %v2483, 7
          %v2485 = vsub.s32 0, %v2484
          %v2486 = vrot.slane %v2481, %v2485
          %v2488 = vadd.f32 %v2473, %v2486
          %v2489 = vadd.f32 %v2474, %v2486
          %v2490 = vadd.f32 %v2475, %v2486
          %v2491 = vadd.f32 %v2476, %v2486
          %v2492 = vadd.f32 %v2477, %v2486
          %v2493 = vadd.f32 %v2478, %v2486
          %v2494 = vadd.f32 %v2479, %v2486
          %v2495 = vadd.f32 %v2480, %v2486
          %2496 = vst [vmem:[%s506] sm:$0xff] %v2488
          %2497 = vst [vmem:[%s506 + $0x8] sm:$0xff] %v2489
          %2498 = vst [vmem:[%s506 + $0x10] sm:$0xff] %v2490
          %2499 = vst [vmem:[%s506 + $0x18] sm:$0xff] %v2491
          %2500 = vst [vmem:[%s506 + $0x20] sm:$0xff] %v2492
          %2501 = vst [vmem:[%s506 + $0x28] sm:$0xff] %v2493
          %2502 = vst [vmem:[%s506 + $0x30] sm:$0xff] %v2494
          %2503 = vst [vmem:[%s506 + $0x38] sm:$0xff] %v2495
        $region92: #{tpu_custom_call.1} parent=63 // pred_fallthru
          _
        %s2504 = sand.u32 %s297, 1
        %s2505 = scalar_lea.sflag [#allocation9], %s2504
        %s2506 = sand.u32 %s297, 1
        %s2507 = smul.addr %s2506, 64
        %s2508 = scalar_lea.vmem [#allocation16], %s2507
        // Predicated region
        $region93: #{tpu_custom_call.1} parent=63 // pred_check
          %p2509 = pneg %p307
        $region94: #{tpu_custom_call.1} parent=63 // pred_check_branch
          %2511 = sbr.rel (%p2509) target = $region96
        $region95: #{tpu_custom_call.1} parent=63 // pred_region
          %s2512 = smul.u32 4, %s38
          %s2514 = ssub.s32 1024, 1024
          %2515 = vsyncadd %s2505, %s2514
          %s2516 = smul.addr %s2512, 2
          %s2517 = smul.addr %s2516, 128
          %s2518 = scalar_lea.hbm %s12, %s2517
          %s2519 = sshll.u32 %s2508, 4
          %s2520 = int_to_ptr.vmem [resolvable:$true] %s2519
          %2525 = dma.vmem_to_hbm [thread:$0]  %s2520, 1024, %s2518, %s2505, 128, 128, 8
        $region96: #{tpu_custom_call.1} parent=63 // pred_fallthru
          _
      $region64: #{tpu_custom_call.1} parent=5 // pred_fallthru
        _
      %p2526 = scmp.le.s32.totalorder 2, %s29
      // Predicated region
      $region97: #{tpu_custom_call.1} parent=5 // pred_check
        %p2527 = pneg %p2526
      $region98: #{tpu_custom_call.1} parent=5 // pred_check_branch
        %2529 = sbr.rel (%p2527) target = $region100
      $region99: #{tpu_custom_call.1} parent=5 // pred_region
        %s2530 = ssub.s32 %s29, 2
        // Predicated region
        $region101: #{tpu_custom_call.1} parent=99 // pred_check
          %p2531 = pneg %p313
        $region102: #{tpu_custom_call.1} parent=99 // pred_check_branch
          %2533 = sbr.rel (%p2531) target = $region104
        $region103: #{tpu_custom_call.1} parent=99 // pred_region
          %s2534 = sand.u32 %s298, 1
          %s2535 = scalar_lea.sflag [#allocation9], %s2534
          %s2536 = sand.u32 %s298, 1
          %s2537 = smul.addr %s2536, 64
          %s2538 = scalar_lea.vmem [#allocation16], %s2537
          %2539 = dma.done %s2535, 1024
        $region104: #{tpu_custom_call.1} parent=99 // pred_fallthru
          _
      $region100: #{tpu_custom_call.1} parent=5 // pred_fallthru
        _
    $region6: #{tpu_custom_call.1} parent=1 // loop_footer
      %s33 = sadd.s32 1, %s29
    $region7: #{tpu_custom_call.1} parent=1 // loop_footer_branch
      %28 = sbr.rel target = $region3
    $region8: #{tpu_custom_call.1} parent=1 // loop_exit
      _
    %2540 = vsyncpa [#allocation8], 1
    %s2541 = scalar_lea.sflag [#allocation8], 1
    %2542 = vsyncpa %s2541, 1
    %2543 = vsyncpa [#allocation11], 1
    %s2544 = scalar_lea.sflag [#allocation11], 1
    %2545 = vsyncpa %s2544, 1
    %2546 = vsyncpa [#allocation14], 1
    %2547 = vsyncpa [#allocation9], 1
    %s2548 = scalar_lea.sflag [#allocation9], 1
    %2549 = vsyncpa %s2548, 1

</llo_original>
